<compile_context>
chip_gen: v6e
topology: v6e:2x2x1
jax: 0.10.0
libtpu: 0.0.40
codegen_flags: <defaults>
</compile_context>

<pallas_src>
import functools

import jax
import jax.numpy as jnp
from jax.experimental import pallas as pl
from jax.experimental.pallas import tpu as pltpu

IN_DIM = 784
HID_DIM = 400
HID_PAD = 512          # 400 padded up to a multiple of 128 (zero pad is numerically inert)
OUT_DIM = 10


def _round_up(x, m):
    return (x + m - 1) // m * m


def mlp_kernel(x_ref, w1_ref, b1_ref, w2_ref, b2_ref, w3_ref, b3_ref, o_ref):
    # x tile: [TB, 784]; fed to the MXU in bf16 (skip the cast if the caller already
    # supplies bf16), all accumulation in f32.
    x = x_ref[...]
    if x.dtype != jnp.bfloat16:
        x = x.astype(jnp.bfloat16)
    # fc1: [TB,784] @ [784,512] + [1,512]
    h1 = jnp.dot(x, w1_ref[...], preferred_element_type=jnp.float32) + b1_ref[...]
    # fc2: [TB,512] @ [512,512] + [1,512]
    h2 = (jnp.dot(h1.astype(jnp.bfloat16), w2_ref[...],
                  preferred_element_type=jnp.float32) + b2_ref[...])
    # fc3 in full f32 (w3 stored f32): tiny FLOP cost, tighter parity with the f32 reference.
    o_ref[...] = jnp.dot(h2, w3_ref[...], preferred_element_type=jnp.float32) + b3_ref[...]


def prepare_params(params, weights_dtype=jnp.bfloat16):
    """One-time parameter prep (NOT in the per-call hot path):
    transpose to [in, out], zero-pad hidden 400 -> 512, cast big weights to bf16.
    fc3's weight stays f32 (it is tiny and keeps the last layer exact)."""
    ph = HID_PAD - HID_DIM
    w1 = jnp.pad(params["fc1_w"].T, ((0, 0), (0, ph))).astype(weights_dtype)   # [784, 512]
    w2 = jnp.pad(params["fc2_w"].T, ((0, ph), (0, ph))).astype(weights_dtype)  # [512, 512]
    w3 = jnp.pad(params["fc3_w"].T, ((0, ph), (0, 0))).astype(jnp.float32)     # [512, 10]
    b1 = jnp.pad(params["fc1_b"], (0, ph))[None, :].astype(jnp.float32)        # [1, 512]
    b2 = jnp.pad(params["fc2_b"], (0, ph))[None, :].astype(jnp.float32)        # [1, 512]
    b3 = params["fc3_b"][None, :].astype(jnp.float32)                          # [1, 10]
    return dict(w1=w1, b1=b1, w2=w2, b2=b2, w3=w3, b3=b3)


def _pick_batch_tile(B, batch_tile):
    """Batch tile: multiple of 8 sublanes (or exactly B when B < 8), capped so that
    mid/large batches produce at least ~4 grid steps (>= 2 per v7x TensorCore)."""
    if B <= 8:
        return B  # block dim equal to the full array dim is always legal
    tb = batch_tile
    tb = min(tb, max(8, _round_up(pl.cdiv(B, 4), 8)))   # >= ~4 grid steps
    tb = min(tb, max(8, (B // 8) * 8))                  # never exceed the 8-rounded batch
    return tb


@functools.partial(jax.jit, static_argnames=("batch_tile",))
def neuralnet_stu_forward(x, prepared, *, batch_tile=512):
    """x: [B, 784] float32 (or bfloat16). prepared: output of prepare_params()."""
    B = x.shape[0]
    tb = _pick_batch_tile(B, batch_tile)
    grid = (pl.cdiv(B, tb),)   # no wrapper-side pad: Pallas handles the partial last block

    # Weights/biases: constant block index across the batch grid -> stay VMEM-resident.
    def resident(shape):
        return pl.BlockSpec(shape, lambda i: (0, 0))

    param_bytes = sum(int(v.size) * v.dtype.itemsize for v in prepared.values())
    cost = pl.CostEstimate(
        flops=2 * B * (IN_DIM * HID_PAD + HID_PAD * HID_PAD + HID_PAD * OUT_DIM),
        bytes_accessed=int(x.size) * x.dtype.itemsize + B * OUT_DIM * 4 + param_bytes,
        transcendentals=0,
    )

    out = pl.pallas_call(
        mlp_kernel,
        out_shape=jax.ShapeDtypeStruct((B, OUT_DIM), jnp.float32),
        grid=grid,
        in_specs=[
            pl.BlockSpec((tb, IN_DIM), lambda i: (i, 0)),          # x tile (pipelined)
            resident((IN_DIM, HID_PAD)), resident((1, HID_PAD)),   # w1, b1
            resident((HID_PAD, HID_PAD)), resident((1, HID_PAD)),  # w2, b2
            resident((HID_PAD, OUT_DIM)), resident((1, OUT_DIM)),  # w3, b3
        ],
        out_specs=pl.BlockSpec((tb, OUT_DIM), lambda i: (i, 0)),
        compiler_params=pltpu.CompilerParams(
            dimension_semantics=("parallel",),
            vmem_limit_bytes=48 << 20,
        ),
        cost_estimate=cost,
    )(x, prepared["w1"], prepared["b1"], prepared["w2"], prepared["b2"],
      prepared["w3"], prepared["b3"])
    return out


def init_params(key):
    """Deterministic init mirroring nn.Linear default: U(-1/sqrt(fan_in), 1/sqrt(fan_in))."""
    def linear(key, out_f, in_f):
        kw, kb = jax.random.split(key)
        bound = 1.0 / jnp.sqrt(in_f)
        w = jax.random.uniform(kw, (out_f, in_f), jnp.float32, -bound, bound)
        b = jax.random.uniform(kb, (out_f,), jnp.float32, -bound, bound)
        return w, b

    k1, k2, k3 = jax.random.split(key, 3)
    fc1_w, fc1_b = linear(k1, 400, 784)
    fc2_w, fc2_b = linear(k2, 400, 400)
    fc3_w, fc3_b = linear(k3, 10, 400)
    return dict(fc1_w=fc1_w, fc1_b=fc1_b,
                fc2_w=fc2_w, fc2_b=fc2_b,
                fc3_w=fc3_w, fc3_b=fc3_b)


if __name__ == "__main__":
    key = jax.random.PRNGKey(0)
    kx, kp = jax.random.split(key)
    params = init_params(kp)
    prepared = prepare_params(params)  # one-time prep (transpose + pad + bf16 cast)

    def reference(x):
        # Plain f32 JAX, PyTorch convention (x @ W.T + b), no nonlinearity.
        r = x @ params["fc1_w"].T + params["fc1_b"]
        r = r @ params["fc2_w"].T + params["fc2_b"]
        return r @ params["fc3_w"].T + params["fc3_b"]

    # B=8: exact tile fit.  B=13: ragged batch exercising the no-pad partial last block.
    for B in (8, 13):
        x = jax.random.normal(jax.random.fold_in(kx, B), (B, IN_DIM), jnp.float32)
        out = jax.block_until_ready(neuralnet_stu_forward(x, prepared))
        ref = reference(x)
        assert out.shape == (B, OUT_DIM)
        # Tolerance loosened vs. pure-f32 because fc1/fc2 operands feeding the MXU are bf16
        # (accumulation stays f32, fc3 is full f32); observed error ~1e-3.
        assert jnp.allclose(out, ref, atol=2e-2, rtol=2e-2), (
            f"B={B}: max abs err {jnp.max(jnp.abs(out - ref))}")
    print("KERNEL_OK")
</pallas_src>

<mosaic_0001>
module attributes {stable_mosaic.version = 11 : i64} {
  func.func @mlp_kernel(%arg0: i32, %arg1: memref<8x784xf32, #tpu.memory_space<vmem>>, %arg2: memref<784x512xbf16, #tpu.memory_space<vmem>>, %arg3: memref<1x512xf32, #tpu.memory_space<vmem>>, %arg4: memref<512x512xbf16, #tpu.memory_space<vmem>>, %arg5: memref<1x512xf32, #tpu.memory_space<vmem>>, %arg6: memref<512x10xf32, #tpu.memory_space<vmem>>, %arg7: memref<1x10xf32, #tpu.memory_space<vmem>>, %arg8: memref<8x10xf32, #tpu.memory_space<vmem>>) attributes {dimension_semantics = [#tpu.dimension_semantics<parallel>], iteration_bounds = array<i64: 1>, scalar_prefetch = 0 : i64, scratch_operands = 0 : i64, tpu.core_type = #tpu.core_type<tc>, window_params = [{transform_indices = @transform_0, window_bounds = array<i64: 8, 784>}, {pipeline_mode = #tpu.pipeline_mode<synchronous>, transform_indices = @transform_1, window_bounds = array<i64: 784, 512>}, {pipeline_mode = #tpu.pipeline_mode<synchronous>, transform_indices = @transform_2, window_bounds = array<i64: 1, 512>}, {pipeline_mode = #tpu.pipeline_mode<synchronous>, transform_indices = @transform_3, window_bounds = array<i64: 512, 512>}, {pipeline_mode = #tpu.pipeline_mode<synchronous>, transform_indices = @transform_4, window_bounds = array<i64: 1, 512>}, {pipeline_mode = #tpu.pipeline_mode<synchronous>, transform_indices = @transform_5, window_bounds = array<i64: 512, 10>}, {pipeline_mode = #tpu.pipeline_mode<synchronous>, transform_indices = @transform_6, window_bounds = array<i64: 1, 10>}, {transform_indices = @transform_7, window_bounds = array<i64: 8, 10>}]} {
    %c0 = arith.constant 0 : index
    %c0_0 = arith.constant 0 : index
    %0 = vector.load %arg1[%c0, %c0_0] : memref<8x784xf32, #tpu.memory_space<vmem>>, vector<8x784xf32>
    %1 = arith.truncf %0 : vector<8x784xf32> to vector<8x784xbf16>
    %c0_1 = arith.constant 0 : index
    %c0_2 = arith.constant 0 : index
    %2 = vector.load %arg2[%c0_1, %c0_2] : memref<784x512xbf16, #tpu.memory_space<vmem>>, vector<784x512xbf16>
    %cst = arith.constant dense<0.000000e+00> : vector<8x512xf32>
    %3 = tpu.matmul %1, %2, %cst {dimension_numbers = #tpu.dot_dimension_numbers<[1], [0], [0], [1], [0, 0, 1, 1], [], []>} : vector<8x784xbf16>, vector<784x512xbf16>, vector<8x512xf32> -> vector<8x512xf32>
    %c0_3 = arith.constant 0 : index
    %c0_4 = arith.constant 0 : index
    %4 = vector.load %arg3[%c0_3, %c0_4] : memref<1x512xf32, #tpu.memory_space<vmem>>, vector<1x512xf32>
    %5 = vector.broadcast %4 : vector<1x512xf32> to vector<8x512xf32>
    %6 = arith.addf %3, %5 : vector<8x512xf32>
    %7 = arith.truncf %6 : vector<8x512xf32> to vector<8x512xbf16>
    %c0_5 = arith.constant 0 : index
    %c0_6 = arith.constant 0 : index
    %8 = vector.load %arg4[%c0_5, %c0_6] : memref<512x512xbf16, #tpu.memory_space<vmem>>, vector<512x512xbf16>
    %cst_7 = arith.constant dense<0.000000e+00> : vector<8x512xf32>
    %9 = tpu.matmul %7, %8, %cst_7 {dimension_numbers = #tpu.dot_dimension_numbers<[1], [0], [0], [1], [0, 0, 1, 1], [], []>} : vector<8x512xbf16>, vector<512x512xbf16>, vector<8x512xf32> -> vector<8x512xf32>
    %c0_8 = arith.constant 0 : index
    %c0_9 = arith.constant 0 : index
    %10 = vector.load %arg5[%c0_8, %c0_9] : memref<1x512xf32, #tpu.memory_space<vmem>>, vector<1x512xf32>
    %11 = vector.broadcast %10 : vector<1x512xf32> to vector<8x512xf32>
    %12 = arith.addf %9, %11 : vector<8x512xf32>
    %c0_10 = arith.constant 0 : index
    %c0_11 = arith.constant 0 : index
    %13 = vector.load %arg6[%c0_10, %c0_11] : memref<512x10xf32, #tpu.memory_space<vmem>>, vector<512x10xf32>
    %cst_12 = arith.constant dense<0.000000e+00> : vector<8x10xf32>
    %14 = tpu.matmul %12, %13, %cst_12 {dimension_numbers = #tpu.dot_dimension_numbers<[1], [0], [0], [1], [0, 0, 1, 1], [], []>} : vector<8x512xf32>, vector<512x10xf32>, vector<8x10xf32> -> vector<8x10xf32>
    %c0_13 = arith.constant 0 : index
    %c0_14 = arith.constant 0 : index
    %15 = vector.load %arg7[%c0_13, %c0_14] : memref<1x10xf32, #tpu.memory_space<vmem>>, vector<1x10xf32>
    %16 = vector.broadcast %15 : vector<1x10xf32> to vector<8x10xf32>
    %17 = arith.addf %14, %16 : vector<8x10xf32>
    %c0_15 = arith.constant 0 : index
    %c0_16 = arith.constant 0 : index
    %18 = vector.load %arg8[%c0_15, %c0_16] : memref<8x10xf32, #tpu.memory_space<vmem>>, vector<8x10xf32>
    tpu.vector_store %arg8[%c0_15, %c0_16], %17 {strides = array<i32>} : memref<8x10xf32, #tpu.memory_space<vmem>>, vector<8x10xf32>,
    return
  }
  func.func @transform_0(%arg0: i32) -> (i32, i32) {
    %c0_i32 = arith.constant 0 : i32
    %c0_i32_0 = arith.constant 0 : i32
    return %arg0, %c0_i32 : i32, i32
  }
  func.func @transform_1(%arg0: i32) -> (i32, i32) {
    %c0_i32 = arith.constant 0 : i32
    %c0_i32_0 = arith.constant 0 : i32
    %c0_i32_1 = arith.constant 0 : i32
    return %c0_i32, %c0_i32_0 : i32, i32
  }
  func.func @transform_2(%arg0: i32) -> (i32, i32) {
    %c0_i32 = arith.constant 0 : i32
    %c0_i32_0 = arith.constant 0 : i32
    %c0_i32_1 = arith.constant 0 : i32
    return %c0_i32, %c0_i32_0 : i32, i32
  }
  func.func @transform_3(%arg0: i32) -> (i32, i32) {
    %c0_i32 = arith.constant 0 : i32
    %c0_i32_0 = arith.constant 0 : i32
    %c0_i32_1 = arith.constant 0 : i32
    return %c0_i32, %c0_i32_0 : i32, i32
  }
  func.func @transform_4(%arg0: i32) -> (i32, i32) {
    %c0_i32 = arith.constant 0 : i32
    %c0_i32_0 = arith.constant 0 : i32
    %c0_i32_1 = arith.constant 0 : i32
    return %c0_i32, %c0_i32_0 : i32, i32
  }
  func.func @transform_5(%arg0: i32) -> (i32, i32) {
    %c0_i32 = arith.constant 0 : i32
    %c0_i32_0 = arith.constant 0 : i32
    %c0_i32_1 = arith.constant 0 : i32
    return %c0_i32, %c0_i32_0 : i32, i32
  }
  func.func @transform_6(%arg0: i32) -> (i32, i32) {
    %c0_i32 = arith.constant 0 : i32
    %c0_i32_0 = arith.constant 0 : i32
    %c0_i32_1 = arith.constant 0 : i32
    return %c0_i32, %c0_i32_0 : i32, i32
  }
  func.func @transform_7(%arg0: i32) -> (i32, i32) {
    %c0_i32 = arith.constant 0 : i32
    %c0_i32_0 = arith.constant 0 : i32
    return %arg0, %c0_i32 : i32, i32
  }
}

</mosaic_0001>

<llo_original>
// kernel: neuralnet_stu_forward.1
$region0: #{neuralnet_stu_forward.1}
  #allocation0 [shape = 'u32[]', space=smem, size = 0x4, offset = 0x4, fixed_abs, tag = 'smem constant byte address 0x4 - core index']
  #allocation1 [shape = 'u32[144,128]{1,0:T(1,128)}', space=vmem, size = 0x12000, scoped, tag = 'internal scratch']
  %s0 = inlined_call_operand.vmem [shape: f32[8,784], index: 0, kind: input, shape index: {}]
  %s1 = inlined_call_operand.hbm [shape: bf16[784,512], index: 1, kind: input, shape index: {}]
  %s2 = inlined_call_operand.vmem [shape: f32[1,512], index: 2, kind: input, shape index: {}]
  %s3 = inlined_call_operand.hbm [shape: bf16[512,512], index: 3, kind: input, shape index: {}]
  %s4 = inlined_call_operand.vmem [shape: f32[1,512], index: 4, kind: input, shape index: {}]
  %s5 = inlined_call_operand.vmem [shape: f32[512,10], index: 5, kind: input, shape index: {}]
  %s6 = inlined_call_operand.vmem [shape: f32[1,10], index: 6, kind: input, shape index: {}]
  %s7 = inlined_call_operand.hbm [shape: f32[8,10], index: 7, kind: output, shape index: {}]
  %s8 = sld [smem:[#allocation0]]
  $region46: #{neuralnet_stu_forward.1} parent=0
    _
  %s10 = ssub.s32 1, %s8
  %s11 = scalar_select 0, %s10, %s8
  $region1: #{neuralnet_stu_forward.1} parent=0
    #allocation2 [shape = 'u8[802816]{0}', space=vmem, size = 0xc4000, scoped, tag = 'input window, operand 1, single buffered']
    #allocation3 [shape = 's32[1]{0}', space=sflag, size = 0x4, scoped, tag = 'scoped memory for neuralnet_stu_forward.1']
    #allocation4 [shape = 's32[1]{0}', space=sflag, size = 0x4, scoped, tag = 'scoped memory for neuralnet_stu_forward.1']
    #allocation5 [shape = 'u8[524288]{0}', space=vmem, size = 0x80000, scoped, tag = 'input window, operand 3, single buffered']
    #allocation6 [shape = 's32[1]{0}', space=sflag, size = 0x4, scoped, tag = 'scoped memory for neuralnet_stu_forward.1']
    #allocation7 [shape = 'u8[4096]{0}', space=vmem, size = 0x1000, scoped, tag = 'output window, operand 0, single buffered']
    %12 = vsyncpa [#allocation3], 0
    %13 = vsyncpa [#allocation6], 0
    %14 = vsyncpa [#allocation4], 0
    // Predicated region
    $region2: #{neuralnet_stu_forward.1} parent=1 // pred_check
      _
    $region3: #{neuralnet_stu_forward.1} parent=1 // pred_check_branch
      %16 = sbr.rel (0) target = $region5
    $region4: #{neuralnet_stu_forward.1} parent=1 // pred_region
      _
    $region5: #{neuralnet_stu_forward.1} parent=1 // pred_fallthru
      _
    // Predicated region
    $region6: #{neuralnet_stu_forward.1} parent=1 // pred_check
      _
    $region7: #{neuralnet_stu_forward.1} parent=1 // pred_check_branch
      %18 = sbr.rel (0) target = $region9
    $region8: #{neuralnet_stu_forward.1} parent=1 // pred_region
      %s20 = ssub.s32 25088, 25088
      %21 = vsyncadd [#allocation3], %s20
      %s22 = sshll.u32 [#allocation2], 4
      %s23 = int_to_ptr.vmem [resolvable:$true] %s22
      %28 = dma.hbm_to_vmem [thread:$0]  %s1, 25088, %s23, [#allocation3], 256, 256, 16
    $region9: #{neuralnet_stu_forward.1} parent=1 // pred_fallthru
      _
    // Predicated region
    $region10: #{neuralnet_stu_forward.1} parent=1 // pred_check
      _
    $region11: #{neuralnet_stu_forward.1} parent=1 // pred_check_branch
      %30 = sbr.rel (0) target = $region13
    $region12: #{neuralnet_stu_forward.1} parent=1 // pred_region
      _
    $region13: #{neuralnet_stu_forward.1} parent=1 // pred_fallthru
      _
    // Predicated region
    $region14: #{neuralnet_stu_forward.1} parent=1 // pred_check
      _
    $region15: #{neuralnet_stu_forward.1} parent=1 // pred_check_branch
      %32 = sbr.rel (0) target = $region17
    $region16: #{neuralnet_stu_forward.1} parent=1 // pred_region
      %s34 = ssub.s32 16384, 16384
      %35 = vsyncadd [#allocation6], %s34
      %s36 = sshll.u32 [#allocation5], 4
      %s37 = int_to_ptr.vmem [resolvable:$true] %s36
      %42 = dma.hbm_to_vmem [thread:$0]  %s3, 16384, %s37, [#allocation6], 256, 256, 16
    $region17: #{neuralnet_stu_forward.1} parent=1 // pred_fallthru
      _
    // Predicated region
    $region18: #{neuralnet_stu_forward.1} parent=1 // pred_check
      _
    $region19: #{neuralnet_stu_forward.1} parent=1 // pred_check_branch
      %44 = sbr.rel (0) target = $region21
    $region20: #{neuralnet_stu_forward.1} parent=1 // pred_region
      _
    $region21: #{neuralnet_stu_forward.1} parent=1 // pred_fallthru
      _
    // Predicated region
    $region22: #{neuralnet_stu_forward.1} parent=1 // pred_check
      _
    $region23: #{neuralnet_stu_forward.1} parent=1 // pred_check_branch
      %46 = sbr.rel (0) target = $region25
    $region24: #{neuralnet_stu_forward.1} parent=1 // pred_region
      _
    $region25: #{neuralnet_stu_forward.1} parent=1 // pred_fallthru
      _
    // Predicated region
    $region26: #{neuralnet_stu_forward.1} parent=1 // pred_check
      _
    $region27: #{neuralnet_stu_forward.1} parent=1 // pred_check_branch
      %48 = sbr.rel (0) target = $region29
    $region28: #{neuralnet_stu_forward.1} parent=1 // pred_region
      _
    $region29: #{neuralnet_stu_forward.1} parent=1 // pred_fallthru
      _
    // Predicated region
    $region30: #{neuralnet_stu_forward.1} parent=1 // pred_check
      _
    $region31: #{neuralnet_stu_forward.1} parent=1 // pred_check_branch
      %50 = sbr.rel (0) target = $region33
    $region32: #{neuralnet_stu_forward.1} parent=1 // pred_region
      %51 = dma.done [#allocation3], 25088
    $region33: #{neuralnet_stu_forward.1} parent=1 // pred_fallthru
      _
    // Predicated region
    $region34: #{neuralnet_stu_forward.1} parent=1 // pred_check
      _
    $region35: #{neuralnet_stu_forward.1} parent=1 // pred_check_branch
      %53 = sbr.rel (0) target = $region37
    $region36: #{neuralnet_stu_forward.1} parent=1 // pred_region
      %54 = dma.done [#allocation6], 16384
    $region37: #{neuralnet_stu_forward.1} parent=1 // pred_fallthru
      _
    %v56 = vld [vmem:[%s0] sm:$0xff]
    %v57 = vld [vmem:[%s0 + $0x8] sm:$0xff]
    %v58 = vld [vmem:[%s0 + $0x10] sm:$0xff]
    %v59 = vld [vmem:[%s0 + $0x18] sm:$0xff]
    %v60 = vld [vmem:[%s0 + $0x20] sm:$0xff]
    %v61 = vld [vmem:[%s0 + $0x28] sm:$0xff]
    %v62 = vld [vmem:[%s0 + $0x30] sm:$0xff]
    %v63 = vpack.c.bf16 %v56, %v56
    %v64 = vpack.c.bf16 %v57, %v57
    %v65 = vpack.c.bf16 %v58, %v58
    %v66 = vpack.c.bf16 %v59, %v59
    %v67 = vpack.c.bf16 %v60, %v60
    %v68 = vpack.c.bf16 %v61, %v61
    %v69 = vpack.c.bf16 %v62, %v62
    %v70 = vld [vmem:[#allocation2] sm:$0xff]
    %v71 = vld [vmem:[#allocation2 + $0x8] sm:$0xff]
    %v72 = vld [vmem:[#allocation2 + $0x10] sm:$0xff]
    %v73 = vld [vmem:[#allocation2 + $0x18] sm:$0xff]
    %v74 = vld [vmem:[#allocation2 + $0x20] sm:$0xff]
    %v75 = vld [vmem:[#allocation2 + $0x28] sm:$0xff]
    %v76 = vld [vmem:[#allocation2 + $0x30] sm:$0xff]
    %v77 = vld [vmem:[#allocation2 + $0x38] sm:$0xff]
    %v78 = vld [vmem:[#allocation2 + $0x40] sm:$0xff]
    %v79 = vld [vmem:[#allocation2 + $0x48] sm:$0xff]
    %v80 = vld [vmem:[#allocation2 + $0x50] sm:$0xff]
    %v81 = vld [vmem:[#allocation2 + $0x58] sm:$0xff]
    %v82 = vld [vmem:[#allocation2 + $0x60] sm:$0xff]
    %v83 = vld [vmem:[#allocation2 + $0x68] sm:$0xff]
    %v84 = vld [vmem:[#allocation2 + $0x70] sm:$0xff]
    %v85 = vld [vmem:[#allocation2 + $0x78] sm:$0xff]
    %v86 = vld [vmem:[#allocation2 + $0x80] sm:$0xff]
    %v87 = vld [vmem:[#allocation2 + $0x88] sm:$0xff]
    %v88 = vld [vmem:[#allocation2 + $0x90] sm:$0xff]
    %v89 = vld [vmem:[#allocation2 + $0x98] sm:$0xff]
    %v90 = vld [vmem:[#allocation2 + $0xa0] sm:$0xff]
    %v91 = vld [vmem:[#allocation2 + $0xa8] sm:$0xff]
    %v92 = vld [vmem:[#allocation2 + $0xb0] sm:$0xff]
    %v93 = vld [vmem:[#allocation2 + $0xb8] sm:$0xff]
    %v94 = vld [vmem:[#allocation2 + $0xc0] sm:$0xff]
    %v95 = vld [vmem:[#allocation2 + $0xc8] sm:$0xff]
    %v96 = vld [vmem:[#allocation2 + $0xd0] sm:$0xff]
    %v97 = vld [vmem:[#allocation2 + $0xd8] sm:$0xff]
    %v98 = vld [vmem:[#allocation2 + $0xe0] sm:$0xff]
    %v99 = vld [vmem:[#allocation2 + $0xe8] sm:$0xff]
    %v100 = vld [vmem:[#allocation2 + $0xf0] sm:$0xff]
    %v101 = vld [vmem:[#allocation2 + $0xf8] sm:$0xff]
    %v102 = vld [vmem:[#allocation2 + $0x100] sm:$0xff]
    %v103 = vld [vmem:[#allocation2 + $0x108] sm:$0xff]
    %v104 = vld [vmem:[#allocation2 + $0x110] sm:$0xff]
    %v105 = vld [vmem:[#allocation2 + $0x118] sm:$0xff]
    %v106 = vld [vmem:[#allocation2 + $0x120] sm:$0xff]
    %v107 = vld [vmem:[#allocation2 + $0x128] sm:$0xff]
    %v108 = vld [vmem:[#allocation2 + $0x130] sm:$0xff]
    %v109 = vld [vmem:[#allocation2 + $0x138] sm:$0xff]
    %v110 = vld [vmem:[#allocation2 + $0x140] sm:$0xff]
    %v111 = vld [vmem:[#allocation2 + $0x148] sm:$0xff]
    %v112 = vld [vmem:[#allocation2 + $0x150] sm:$0xff]
    %v113 = vld [vmem:[#allocation2 + $0x158] sm:$0xff]
    %v114 = vld [vmem:[#allocation2 + $0x160] sm:$0xff]
    %v115 = vld [vmem:[#allocation2 + $0x168] sm:$0xff]
    %v116 = vld [vmem:[#allocation2 + $0x170] sm:$0xff]
    %v117 = vld [vmem:[#allocation2 + $0x178] sm:$0xff]
    %v118 = vld [vmem:[#allocation2 + $0x180] sm:$0xff]
    %v119 = vld [vmem:[#allocation2 + $0x188] sm:$0xff]
    %v120 = vld [vmem:[#allocation2 + $0x190] sm:$0xff]
    %v121 = vld [vmem:[#allocation2 + $0x198] sm:$0xff]
    %v122 = vld [vmem:[#allocation2 + $0x1a0] sm:$0xff]
    %v123 = vld [vmem:[#allocation2 + $0x1a8] sm:$0xff]
    %v124 = vld [vmem:[#allocation2 + $0x1b0] sm:$0xff]
    %v125 = vld [vmem:[#allocation2 + $0x1b8] sm:$0xff]
    %v126 = vld [vmem:[#allocation2 + $0x1c0] sm:$0xff]
    %v127 = vld [vmem:[#allocation2 + $0x1c8] sm:$0xff]
    %v128 = vld [vmem:[#allocation2 + $0x1d0] sm:$0xff]
    %v129 = vld [vmem:[#allocation2 + $0x1d8] sm:$0xff]
    %v130 = vld [vmem:[#allocation2 + $0x1e0] sm:$0xff]
    %v131 = vld [vmem:[#allocation2 + $0x1e8] sm:$0xff]
    %v132 = vld [vmem:[#allocation2 + $0x1f0] sm:$0xff]
    %v133 = vld [vmem:[#allocation2 + $0x1f8] sm:$0xff]
    %v134 = vld [vmem:[#allocation2 + $0x200] sm:$0xff]
    %v135 = vld [vmem:[#allocation2 + $0x208] sm:$0xff]
    %v136 = vld [vmem:[#allocation2 + $0x210] sm:$0xff]
    %v137 = vld [vmem:[#allocation2 + $0x218] sm:$0xff]
    %v138 = vld [vmem:[#allocation2 + $0x220] sm:$0xff]
    %v139 = vld [vmem:[#allocation2 + $0x228] sm:$0xff]
    %v140 = vld [vmem:[#allocation2 + $0x230] sm:$0xff]
    %v141 = vld [vmem:[#allocation2 + $0x238] sm:$0xff]
    %v142 = vld [vmem:[#allocation2 + $0x240] sm:$0xff]
    %v143 = vld [vmem:[#allocation2 + $0x248] sm:$0xff]
    %v144 = vld [vmem:[#allocation2 + $0x250] sm:$0xff]
    %v145 = vld [vmem:[#allocation2 + $0x258] sm:$0xff]
    %v146 = vld [vmem:[#allocation2 + $0x260] sm:$0xff]
    %v147 = vld [vmem:[#allocation2 + $0x268] sm:$0xff]
    %v148 = vld [vmem:[#allocation2 + $0x270] sm:$0xff]
    %v149 = vld [vmem:[#allocation2 + $0x278] sm:$0xff]
    %v150 = vld [vmem:[#allocation2 + $0x280] sm:$0xff]
    %v151 = vld [vmem:[#allocation2 + $0x288] sm:$0xff]
    %v152 = vld [vmem:[#allocation2 + $0x290] sm:$0xff]
    %v153 = vld [vmem:[#allocation2 + $0x298] sm:$0xff]
    %v154 = vld [vmem:[#allocation2 + $0x2a0] sm:$0xff]
    %v155 = vld [vmem:[#allocation2 + $0x2a8] sm:$0xff]
    %v156 = vld [vmem:[#allocation2 + $0x2b0] sm:$0xff]
    %v157 = vld [vmem:[#allocation2 + $0x2b8] sm:$0xff]
    %v158 = vld [vmem:[#allocation2 + $0x2c0] sm:$0xff]
    %v159 = vld [vmem:[#allocation2 + $0x2c8] sm:$0xff]
    %v160 = vld [vmem:[#allocation2 + $0x2d0] sm:$0xff]
    %v161 = vld [vmem:[#allocation2 + $0x2d8] sm:$0xff]
    %v162 = vld [vmem:[#allocation2 + $0x2e0] sm:$0xff]
    %v163 = vld [vmem:[#allocation2 + $0x2e8] sm:$0xff]
    %v164 = vld [vmem:[#allocation2 + $0x2f0] sm:$0xff]
    %v165 = vld [vmem:[#allocation2 + $0x2f8] sm:$0xff]
    %v166 = vld [vmem:[#allocation2 + $0x300] sm:$0xff]
    %v167 = vld [vmem:[#allocation2 + $0x308] sm:$0xff]
    %v168 = vld [vmem:[#allocation2 + $0x310] sm:$0xff]
    %v169 = vld [vmem:[#allocation2 + $0x318] sm:$0xff]
    %v170 = vld [vmem:[#allocation2 + $0x320] sm:$0xff]
    %v171 = vld [vmem:[#allocation2 + $0x328] sm:$0xff]
    %v172 = vld [vmem:[#allocation2 + $0x330] sm:$0xff]
    %v173 = vld [vmem:[#allocation2 + $0x338] sm:$0xff]
    %v174 = vld [vmem:[#allocation2 + $0x340] sm:$0xff]
    %v175 = vld [vmem:[#allocation2 + $0x348] sm:$0xff]
    %v176 = vld [vmem:[#allocation2 + $0x350] sm:$0xff]
    %v177 = vld [vmem:[#allocation2 + $0x358] sm:$0xff]
    %v178 = vld [vmem:[#allocation2 + $0x360] sm:$0xff]
    %v179 = vld [vmem:[#allocation2 + $0x368] sm:$0xff]
    %v180 = vld [vmem:[#allocation2 + $0x370] sm:$0xff]
    %v181 = vld [vmem:[#allocation2 + $0x378] sm:$0xff]
    %v182 = vld [vmem:[#allocation2 + $0x380] sm:$0xff]
    %v183 = vld [vmem:[#allocation2 + $0x388] sm:$0xff]
    %v184 = vld [vmem:[#allocation2 + $0x390] sm:$0xff]
    %v185 = vld [vmem:[#allocation2 + $0x398] sm:$0xff]
    %v186 = vld [vmem:[#allocation2 + $0x3a0] sm:$0xff]
    %v187 = vld [vmem:[#allocation2 + $0x3a8] sm:$0xff]
    %v188 = vld [vmem:[#allocation2 + $0x3b0] sm:$0xff]
    %v189 = vld [vmem:[#allocation2 + $0x3b8] sm:$0xff]
    %v190 = vld [vmem:[#allocation2 + $0x3c0] sm:$0xff]
    %v191 = vld [vmem:[#allocation2 + $0x3c8] sm:$0xff]
    %v192 = vld [vmem:[#allocation2 + $0x3d0] sm:$0xff]
    %v193 = vld [vmem:[#allocation2 + $0x3d8] sm:$0xff]
    %v194 = vld [vmem:[#allocation2 + $0x3e0] sm:$0xff]
    %v195 = vld [vmem:[#allocation2 + $0x3e8] sm:$0xff]
    %v196 = vld [vmem:[#allocation2 + $0x3f0] sm:$0xff]
    %v197 = vld [vmem:[#allocation2 + $0x3f8] sm:$0xff]
    %v198 = vld [vmem:[#allocation2 + $0x400] sm:$0xff]
    %v199 = vld [vmem:[#allocation2 + $0x408] sm:$0xff]
    %v200 = vld [vmem:[#allocation2 + $0x410] sm:$0xff]
    %v201 = vld [vmem:[#allocation2 + $0x418] sm:$0xff]
    %v202 = vld [vmem:[#allocation2 + $0x420] sm:$0xff]
    %v203 = vld [vmem:[#allocation2 + $0x428] sm:$0xff]
    %v204 = vld [vmem:[#allocation2 + $0x430] sm:$0xff]
    %v205 = vld [vmem:[#allocation2 + $0x438] sm:$0xff]
    %v206 = vld [vmem:[#allocation2 + $0x440] sm:$0xff]
    %v207 = vld [vmem:[#allocation2 + $0x448] sm:$0xff]
    %v208 = vld [vmem:[#allocation2 + $0x450] sm:$0xff]
    %v209 = vld [vmem:[#allocation2 + $0x458] sm:$0xff]
    %v210 = vld [vmem:[#allocation2 + $0x460] sm:$0xff]
    %v211 = vld [vmem:[#allocation2 + $0x468] sm:$0xff]
    %v212 = vld [vmem:[#allocation2 + $0x470] sm:$0xff]
    %v213 = vld [vmem:[#allocation2 + $0x478] sm:$0xff]
    %v214 = vld [vmem:[#allocation2 + $0x480] sm:$0xff]
    %v215 = vld [vmem:[#allocation2 + $0x488] sm:$0xff]
    %v216 = vld [vmem:[#allocation2 + $0x490] sm:$0xff]
    %v217 = vld [vmem:[#allocation2 + $0x498] sm:$0xff]
    %v218 = vld [vmem:[#allocation2 + $0x4a0] sm:$0xff]
    %v219 = vld [vmem:[#allocation2 + $0x4a8] sm:$0xff]
    %v220 = vld [vmem:[#allocation2 + $0x4b0] sm:$0xff]
    %v221 = vld [vmem:[#allocation2 + $0x4b8] sm:$0xff]
    %v222 = vld [vmem:[#allocation2 + $0x4c0] sm:$0xff]
    %v223 = vld [vmem:[#allocation2 + $0x4c8] sm:$0xff]
    %v224 = vld [vmem:[#allocation2 + $0x4d0] sm:$0xff]
    %v225 = vld [vmem:[#allocation2 + $0x4d8] sm:$0xff]
    %v226 = vld [vmem:[#allocation2 + $0x4e0] sm:$0xff]
    %v227 = vld [vmem:[#allocation2 + $0x4e8] sm:$0xff]
    %v228 = vld [vmem:[#allocation2 + $0x4f0] sm:$0xff]
    %v229 = vld [vmem:[#allocation2 + $0x4f8] sm:$0xff]
    %v230 = vld [vmem:[#allocation2 + $0x500] sm:$0xff]
    %v231 = vld [vmem:[#allocation2 + $0x508] sm:$0xff]
    %v232 = vld [vmem:[#allocation2 + $0x510] sm:$0xff]
    %v233 = vld [vmem:[#allocation2 + $0x518] sm:$0xff]
    %v234 = vld [vmem:[#allocation2 + $0x520] sm:$0xff]
    %v235 = vld [vmem:[#allocation2 + $0x528] sm:$0xff]
    %v236 = vld [vmem:[#allocation2 + $0x530] sm:$0xff]
    %v237 = vld [vmem:[#allocation2 + $0x538] sm:$0xff]
    %v238 = vld [vmem:[#allocation2 + $0x540] sm:$0xff]
    %v239 = vld [vmem:[#allocation2 + $0x548] sm:$0xff]
    %v240 = vld [vmem:[#allocation2 + $0x550] sm:$0xff]
    %v241 = vld [vmem:[#allocation2 + $0x558] sm:$0xff]
    %v242 = vld [vmem:[#allocation2 + $0x560] sm:$0xff]
    %v243 = vld [vmem:[#allocation2 + $0x568] sm:$0xff]
    %v244 = vld [vmem:[#allocation2 + $0x570] sm:$0xff]
    %v245 = vld [vmem:[#allocation2 + $0x578] sm:$0xff]
    %v246 = vld [vmem:[#allocation2 + $0x580] sm:$0xff]
    %v247 = vld [vmem:[#allocation2 + $0x588] sm:$0xff]
    %v248 = vld [vmem:[#allocation2 + $0x590] sm:$0xff]
    %v249 = vld [vmem:[#allocation2 + $0x598] sm:$0xff]
    %v250 = vld [vmem:[#allocation2 + $0x5a0] sm:$0xff]
    %v251 = vld [vmem:[#allocation2 + $0x5a8] sm:$0xff]
    %v252 = vld [vmem:[#allocation2 + $0x5b0] sm:$0xff]
    %v253 = vld [vmem:[#allocation2 + $0x5b8] sm:$0xff]
    %v254 = vld [vmem:[#allocation2 + $0x5c0] sm:$0xff]
    %v255 = vld [vmem:[#allocation2 + $0x5c8] sm:$0xff]
    %v256 = vld [vmem:[#allocation2 + $0x5d0] sm:$0xff]
    %v257 = vld [vmem:[#allocation2 + $0x5d8] sm:$0xff]
    %v258 = vld [vmem:[#allocation2 + $0x5e0] sm:$0xff]
    %v259 = vld [vmem:[#allocation2 + $0x5e8] sm:$0xff]
    %v260 = vld [vmem:[#allocation2 + $0x5f0] sm:$0xff]
    %v261 = vld [vmem:[#allocation2 + $0x5f8] sm:$0xff]
    %v262 = vld [vmem:[#allocation2 + $0x600] sm:$0xff]
    %v263 = vld [vmem:[#allocation2 + $0x608] sm:$0xff]
    %v264 = vld [vmem:[#allocation2 + $0x610] sm:$0xff]
    %v265 = vld [vmem:[#allocation2 + $0x618] sm:$0xff]
    %v266 = vld [vmem:[%s2] sm:$0xf]
    %v268 = vlaneseq
    %v269 = vshrl.u32 %v268, 7
    %v270 = vsub.s32 0, %v269
    %v271 = vrot.slane %v266, %v270
    %v272 = vlaneseq
    %v273 = vshrl.u32 %v272, 7
    %v274 = vsub.s32 1, %v273
    %v275 = vrot.slane %v266, %v274
    %v276 = vlaneseq
    %v277 = vshrl.u32 %v276, 7
    %v278 = vsub.s32 2, %v277
    %v279 = vrot.slane %v266, %v278
    %v280 = vlaneseq
    %v281 = vshrl.u32 %v280, 7
    %v282 = vsub.s32 3, %v281
    %v283 = vrot.slane %v266, %v282
    %v484 = vunpack.c.l.b16 %v70
    %v485 = vunpack.c.h.b16 %v70
    %v486 = vunpack.c.l.b16 %v71
    %v487 = vunpack.c.h.b16 %v71
    %v488 = vunpack.c.l.b16 %v72
    %v489 = vunpack.c.h.b16 %v72
    %v490 = vunpack.c.l.b16 %v73
    %v491 = vunpack.c.h.b16 %v73
    %v492 = vunpack.c.l.b16 %v74
    %v493 = vunpack.c.h.b16 %v74
    %v494 = vunpack.c.l.b16 %v75
    %v495 = vunpack.c.h.b16 %v75
    %v496 = vunpack.c.l.b16 %v76
    %v497 = vunpack.c.h.b16 %v76
    %v498 = vunpack.c.l.b16 %v77
    %v499 = vunpack.c.h.b16 %v77
    %v500 = vunpack.c.l.b16 %v78
    %v501 = vunpack.c.h.b16 %v78
    %v502 = vunpack.c.l.b16 %v79
    %v503 = vunpack.c.h.b16 %v79
    %v504 = vunpack.c.l.b16 %v80
    %v505 = vunpack.c.h.b16 %v80
    %v506 = vunpack.c.l.b16 %v81
    %v507 = vunpack.c.h.b16 %v81
    %v508 = vunpack.c.l.b16 %v82
    %v509 = vunpack.c.h.b16 %v82
    %v510 = vunpack.c.l.b16 %v83
    %v511 = vunpack.c.h.b16 %v83
    %v512 = vunpack.c.l.b16 %v84
    %v513 = vunpack.c.h.b16 %v84
    %v514 = vunpack.c.l.b16 %v85
    %v515 = vunpack.c.h.b16 %v85
    %v516 = vunpack.c.l.b16 %v86
    %v517 = vunpack.c.h.b16 %v86
    %v518 = vunpack.c.l.b16 %v87
    %v519 = vunpack.c.h.b16 %v87
    %v520 = vunpack.c.l.b16 %v88
    %v521 = vunpack.c.h.b16 %v88
    %v522 = vunpack.c.l.b16 %v89
    %v523 = vunpack.c.h.b16 %v89
    %v524 = vunpack.c.l.b16 %v90
    %v525 = vunpack.c.h.b16 %v90
    %v526 = vunpack.c.l.b16 %v91
    %v527 = vunpack.c.h.b16 %v91
    %v528 = vunpack.c.l.b16 %v92
    %v529 = vunpack.c.h.b16 %v92
    %v530 = vunpack.c.l.b16 %v93
    %v531 = vunpack.c.h.b16 %v93
    %v532 = vunpack.c.l.b16 %v94
    %v533 = vunpack.c.h.b16 %v94
    %v534 = vunpack.c.l.b16 %v95
    %v535 = vunpack.c.h.b16 %v95
    %v536 = vunpack.c.l.b16 %v96
    %v537 = vunpack.c.h.b16 %v96
    %v538 = vunpack.c.l.b16 %v97
    %v539 = vunpack.c.h.b16 %v97
    %v540 = vunpack.c.l.b16 %v98
    %v541 = vunpack.c.h.b16 %v98
    %v542 = vunpack.c.l.b16 %v99
    %v543 = vunpack.c.h.b16 %v99
    %v544 = vunpack.c.l.b16 %v100
    %v545 = vunpack.c.h.b16 %v100
    %v546 = vunpack.c.l.b16 %v101
    %v547 = vunpack.c.h.b16 %v101
    %v548 = vunpack.c.l.b16 %v102
    %v549 = vunpack.c.h.b16 %v102
    %v550 = vunpack.c.l.b16 %v103
    %v551 = vunpack.c.h.b16 %v103
    %v552 = vunpack.c.l.b16 %v104
    %v553 = vunpack.c.h.b16 %v104
    %v554 = vunpack.c.l.b16 %v105
    %v555 = vunpack.c.h.b16 %v105
    %v556 = vunpack.c.l.b16 %v106
    %v557 = vunpack.c.h.b16 %v106
    %v558 = vunpack.c.l.b16 %v107
    %v559 = vunpack.c.h.b16 %v107
    %v560 = vunpack.c.l.b16 %v108
    %v561 = vunpack.c.h.b16 %v108
    %v562 = vunpack.c.l.b16 %v109
    %v563 = vunpack.c.h.b16 %v109
    %v564 = vunpack.c.l.b16 %v110
    %v565 = vunpack.c.h.b16 %v110
    %v566 = vunpack.c.l.b16 %v111
    %v567 = vunpack.c.h.b16 %v111
    %v568 = vunpack.c.l.b16 %v112
    %v569 = vunpack.c.h.b16 %v112
    %v570 = vunpack.c.l.b16 %v113
    %v571 = vunpack.c.h.b16 %v113
    %v572 = vunpack.c.l.b16 %v114
    %v573 = vunpack.c.h.b16 %v114
    %v574 = vunpack.c.l.b16 %v115
    %v575 = vunpack.c.h.b16 %v115
    %v576 = vunpack.c.l.b16 %v116
    %v577 = vunpack.c.h.b16 %v116
    %v578 = vunpack.c.l.b16 %v117
    %v579 = vunpack.c.h.b16 %v117
    %v580 = vunpack.c.l.b16 %v118
    %v581 = vunpack.c.h.b16 %v118
    %v582 = vunpack.c.l.b16 %v119
    %v583 = vunpack.c.h.b16 %v119
    %v584 = vunpack.c.l.b16 %v120
    %v585 = vunpack.c.h.b16 %v120
    %v586 = vunpack.c.l.b16 %v121
    %v587 = vunpack.c.h.b16 %v121
    %v588 = vunpack.c.l.b16 %v122
    %v589 = vunpack.c.h.b16 %v122
    %v590 = vunpack.c.l.b16 %v123
    %v591 = vunpack.c.h.b16 %v123
    %v592 = vunpack.c.l.b16 %v124
    %v593 = vunpack.c.h.b16 %v124
    %v594 = vunpack.c.l.b16 %v125
    %v595 = vunpack.c.h.b16 %v125
    %v596 = vunpack.c.l.b16 %v126
    %v597 = vunpack.c.h.b16 %v126
    %v598 = vunpack.c.l.b16 %v127
    %v599 = vunpack.c.h.b16 %v127
    %v600 = vunpack.c.l.b16 %v128
    %v601 = vunpack.c.h.b16 %v128
    %v602 = vunpack.c.l.b16 %v129
    %v603 = vunpack.c.h.b16 %v129
    %v604 = vunpack.c.l.b16 %v130
    %v605 = vunpack.c.h.b16 %v130
    %v606 = vunpack.c.l.b16 %v131
    %v607 = vunpack.c.h.b16 %v131
    %v608 = vunpack.c.l.b16 %v132
    %v609 = vunpack.c.h.b16 %v132
    %v610 = vunpack.c.l.b16 %v133
    %v611 = vunpack.c.h.b16 %v133
    %v612 = vunpack.c.l.b16 %v134
    %v613 = vunpack.c.h.b16 %v134
    %v614 = vunpack.c.l.b16 %v135
    %v615 = vunpack.c.h.b16 %v135
    %v616 = vunpack.c.l.b16 %v136
    %v617 = vunpack.c.h.b16 %v136
    %v618 = vunpack.c.l.b16 %v137
    %v619 = vunpack.c.h.b16 %v137
    %v620 = vunpack.c.l.b16 %v138
    %v621 = vunpack.c.h.b16 %v138
    %v622 = vunpack.c.l.b16 %v139
    %v623 = vunpack.c.h.b16 %v139
    %v624 = vunpack.c.l.b16 %v140
    %v625 = vunpack.c.h.b16 %v140
    %v626 = vunpack.c.l.b16 %v141
    %v627 = vunpack.c.h.b16 %v141
    %v628 = vunpack.c.l.b16 %v142
    %v629 = vunpack.c.h.b16 %v142
    %v630 = vunpack.c.l.b16 %v143
    %v631 = vunpack.c.h.b16 %v143
    %v632 = vunpack.c.l.b16 %v144
    %v633 = vunpack.c.h.b16 %v144
    %v634 = vunpack.c.l.b16 %v145
    %v635 = vunpack.c.h.b16 %v145
    %v636 = vunpack.c.l.b16 %v146
    %v637 = vunpack.c.h.b16 %v146
    %v638 = vunpack.c.l.b16 %v147
    %v639 = vunpack.c.h.b16 %v147
    %v640 = vunpack.c.l.b16 %v148
    %v641 = vunpack.c.h.b16 %v148
    %v642 = vunpack.c.l.b16 %v149
    %v643 = vunpack.c.h.b16 %v149
    %v644 = vunpack.c.l.b16 %v150
    %v645 = vunpack.c.h.b16 %v150
    %v646 = vunpack.c.l.b16 %v151
    %v647 = vunpack.c.h.b16 %v151
    %v648 = vunpack.c.l.b16 %v152
    %v649 = vunpack.c.h.b16 %v152
    %v650 = vunpack.c.l.b16 %v153
    %v651 = vunpack.c.h.b16 %v153
    %v652 = vunpack.c.l.b16 %v154
    %v653 = vunpack.c.h.b16 %v154
    %v654 = vunpack.c.l.b16 %v155
    %v655 = vunpack.c.h.b16 %v155
    %v656 = vunpack.c.l.b16 %v156
    %v657 = vunpack.c.h.b16 %v156
    %v658 = vunpack.c.l.b16 %v157
    %v659 = vunpack.c.h.b16 %v157
    %v660 = vunpack.c.l.b16 %v158
    %v661 = vunpack.c.h.b16 %v158
    %v662 = vunpack.c.l.b16 %v159
    %v663 = vunpack.c.h.b16 %v159
    %v664 = vunpack.c.l.b16 %v160
    %v665 = vunpack.c.h.b16 %v160
    %v666 = vunpack.c.l.b16 %v161
    %v667 = vunpack.c.h.b16 %v161
    %v668 = vunpack.c.l.b16 %v162
    %v669 = vunpack.c.h.b16 %v162
    %v670 = vunpack.c.l.b16 %v163
    %v671 = vunpack.c.h.b16 %v163
    %v672 = vunpack.c.l.b16 %v164
    %v673 = vunpack.c.h.b16 %v164
    %v674 = vunpack.c.l.b16 %v165
    %v675 = vunpack.c.h.b16 %v165
    %v676 = vunpack.c.l.b16 %v166
    %v677 = vunpack.c.h.b16 %v166
    %v678 = vunpack.c.l.b16 %v167
    %v679 = vunpack.c.h.b16 %v167
    %v680 = vunpack.c.l.b16 %v168
    %v681 = vunpack.c.h.b16 %v168
    %v682 = vunpack.c.l.b16 %v169
    %v683 = vunpack.c.h.b16 %v169
    %v684 = vunpack.c.l.b16 %v170
    %v685 = vunpack.c.h.b16 %v170
    %v686 = vunpack.c.l.b16 %v171
    %v687 = vunpack.c.h.b16 %v171
    %v688 = vunpack.c.l.b16 %v172
    %v689 = vunpack.c.h.b16 %v172
    %v690 = vunpack.c.l.b16 %v173
    %v691 = vunpack.c.h.b16 %v173
    %v692 = vunpack.c.l.b16 %v174
    %v693 = vunpack.c.h.b16 %v174
    %v694 = vunpack.c.l.b16 %v175
    %v695 = vunpack.c.h.b16 %v175
    %v696 = vunpack.c.l.b16 %v176
    %v697 = vunpack.c.h.b16 %v176
    %v698 = vunpack.c.l.b16 %v177
    %v699 = vunpack.c.h.b16 %v177
    %v700 = vunpack.c.l.b16 %v178
    %v701 = vunpack.c.h.b16 %v178
    %v702 = vunpack.c.l.b16 %v179
    %v703 = vunpack.c.h.b16 %v179
    %v704 = vunpack.c.l.b16 %v180
    %v705 = vunpack.c.h.b16 %v180
    %v706 = vunpack.c.l.b16 %v181
    %v707 = vunpack.c.h.b16 %v181
    %v708 = vunpack.c.l.b16 %v182
    %v709 = vunpack.c.h.b16 %v182
    %v710 = vunpack.c.l.b16 %v183
    %v711 = vunpack.c.h.b16 %v183
    %v712 = vunpack.c.l.b16 %v184
    %v713 = vunpack.c.h.b16 %v184
    %v714 = vunpack.c.l.b16 %v185
    %v715 = vunpack.c.h.b16 %v185
    %v716 = vunpack.c.l.b16 %v186
    %v717 = vunpack.c.h.b16 %v186
    %v718 = vunpack.c.l.b16 %v187
    %v719 = vunpack.c.h.b16 %v187
    %v720 = vunpack.c.l.b16 %v188
    %v721 = vunpack.c.h.b16 %v188
    %v722 = vunpack.c.l.b16 %v189
    %v723 = vunpack.c.h.b16 %v189
    %v724 = vunpack.c.l.b16 %v190
    %v725 = vunpack.c.h.b16 %v190
    %v726 = vunpack.c.l.b16 %v191
    %v727 = vunpack.c.h.b16 %v191
    %v728 = vunpack.c.l.b16 %v192
    %v729 = vunpack.c.h.b16 %v192
    %v730 = vunpack.c.l.b16 %v193
    %v731 = vunpack.c.h.b16 %v193
    %v732 = vunpack.c.l.b16 %v194
    %v733 = vunpack.c.h.b16 %v194
    %v734 = vunpack.c.l.b16 %v195
    %v735 = vunpack.c.h.b16 %v195
    %v736 = vunpack.c.l.b16 %v196
    %v737 = vunpack.c.h.b16 %v196
    %v738 = vunpack.c.l.b16 %v197
    %v739 = vunpack.c.h.b16 %v197
    %v740 = vunpack.c.l.b16 %v198
    %v741 = vunpack.c.h.b16 %v198
    %v742 = vunpack.c.l.b16 %v199
    %v743 = vunpack.c.h.b16 %v199
    %v744 = vunpack.c.l.b16 %v200
    %v745 = vunpack.c.h.b16 %v200
    %v746 = vunpack.c.l.b16 %v201
    %v747 = vunpack.c.h.b16 %v201
    %v748 = vunpack.c.l.b16 %v202
    %v749 = vunpack.c.h.b16 %v202
    %v750 = vunpack.c.l.b16 %v203
    %v751 = vunpack.c.h.b16 %v203
    %v752 = vunpack.c.l.b16 %v204
    %v753 = vunpack.c.h.b16 %v204
    %v754 = vunpack.c.l.b16 %v205
    %v755 = vunpack.c.h.b16 %v205
    %v756 = vunpack.c.l.b16 %v206
    %v757 = vunpack.c.h.b16 %v206
    %v758 = vunpack.c.l.b16 %v207
    %v759 = vunpack.c.h.b16 %v207
    %v760 = vunpack.c.l.b16 %v208
    %v761 = vunpack.c.h.b16 %v208
    %v762 = vunpack.c.l.b16 %v209
    %v763 = vunpack.c.h.b16 %v209
    %v764 = vunpack.c.l.b16 %v210
    %v765 = vunpack.c.h.b16 %v210
    %v766 = vunpack.c.l.b16 %v211
    %v767 = vunpack.c.h.b16 %v211
    %v768 = vunpack.c.l.b16 %v212
    %v769 = vunpack.c.h.b16 %v212
    %v770 = vunpack.c.l.b16 %v213
    %v771 = vunpack.c.h.b16 %v213
    %v772 = vunpack.c.l.b16 %v214
    %v773 = vunpack.c.h.b16 %v214
    %v774 = vunpack.c.l.b16 %v215
    %v775 = vunpack.c.h.b16 %v215
    %v776 = vunpack.c.l.b16 %v216
    %v777 = vunpack.c.h.b16 %v216
    %v778 = vunpack.c.l.b16 %v217
    %v779 = vunpack.c.h.b16 %v217
    %v780 = vunpack.c.l.b16 %v218
    %v781 = vunpack.c.h.b16 %v218
    %v782 = vunpack.c.l.b16 %v219
    %v783 = vunpack.c.h.b16 %v219
    %v784 = vunpack.c.l.b16 %v220
    %v785 = vunpack.c.h.b16 %v220
    %v786 = vunpack.c.l.b16 %v221
    %v787 = vunpack.c.h.b16 %v221
    %v788 = vunpack.c.l.b16 %v222
    %v789 = vunpack.c.h.b16 %v222
    %v790 = vunpack.c.l.b16 %v223
    %v791 = vunpack.c.h.b16 %v223
    %v792 = vunpack.c.l.b16 %v224
    %v793 = vunpack.c.h.b16 %v224
    %v794 = vunpack.c.l.b16 %v225
    %v795 = vunpack.c.h.b16 %v225
    %v796 = vunpack.c.l.b16 %v226
    %v797 = vunpack.c.h.b16 %v226
    %v798 = vunpack.c.l.b16 %v227
    %v799 = vunpack.c.h.b16 %v227
    %v800 = vunpack.c.l.b16 %v228
    %v801 = vunpack.c.h.b16 %v228
    %v802 = vunpack.c.l.b16 %v229
    %v803 = vunpack.c.h.b16 %v229
    %v804 = vunpack.c.l.b16 %v230
    %v805 = vunpack.c.h.b16 %v230
    %v806 = vunpack.c.l.b16 %v231
    %v807 = vunpack.c.h.b16 %v231
    %v808 = vunpack.c.l.b16 %v232
    %v809 = vunpack.c.h.b16 %v232
    %v810 = vunpack.c.l.b16 %v233
    %v811 = vunpack.c.h.b16 %v233
    %v812 = vunpack.c.l.b16 %v234
    %v813 = vunpack.c.h.b16 %v234
    %v814 = vunpack.c.l.b16 %v235
    %v815 = vunpack.c.h.b16 %v235
    %v816 = vunpack.c.l.b16 %v236
    %v817 = vunpack.c.h.b16 %v236
    %v818 = vunpack.c.l.b16 %v237
    %v819 = vunpack.c.h.b16 %v237
    %v820 = vunpack.c.l.b16 %v238
    %v821 = vunpack.c.h.b16 %v238
    %v822 = vunpack.c.l.b16 %v239
    %v823 = vunpack.c.h.b16 %v239
    %v824 = vunpack.c.l.b16 %v240
    %v825 = vunpack.c.h.b16 %v240
    %v826 = vunpack.c.l.b16 %v241
    %v827 = vunpack.c.h.b16 %v241
    %v828 = vunpack.c.l.b16 %v242
    %v829 = vunpack.c.h.b16 %v242
    %v830 = vunpack.c.l.b16 %v243
    %v831 = vunpack.c.h.b16 %v243
    %v832 = vunpack.c.l.b16 %v244
    %v833 = vunpack.c.h.b16 %v244
    %v834 = vunpack.c.l.b16 %v245
    %v835 = vunpack.c.h.b16 %v245
    %v836 = vunpack.c.l.b16 %v246
    %v837 = vunpack.c.h.b16 %v246
    %v838 = vunpack.c.l.b16 %v247
    %v839 = vunpack.c.h.b16 %v247
    %v840 = vunpack.c.l.b16 %v248
    %v841 = vunpack.c.h.b16 %v248
    %v842 = vunpack.c.l.b16 %v249
    %v843 = vunpack.c.h.b16 %v249
    %v844 = vunpack.c.l.b16 %v250
    %v845 = vunpack.c.h.b16 %v250
    %v846 = vunpack.c.l.b16 %v251
    %v847 = vunpack.c.h.b16 %v251
    %v848 = vunpack.c.l.b16 %v252
    %v849 = vunpack.c.h.b16 %v252
    %v850 = vunpack.c.l.b16 %v253
    %v851 = vunpack.c.h.b16 %v253
    %v852 = vunpack.c.l.b16 %v254
    %v853 = vunpack.c.h.b16 %v254
    %v854 = vunpack.c.l.b16 %v255
    %v855 = vunpack.c.h.b16 %v255
    %v856 = vunpack.c.l.b16 %v256
    %v857 = vunpack.c.h.b16 %v256
    %v858 = vunpack.c.l.b16 %v257
    %v859 = vunpack.c.h.b16 %v257
    %v860 = vunpack.c.l.b16 %v258
    %v861 = vunpack.c.h.b16 %v258
    %v862 = vunpack.c.l.b16 %v259
    %v863 = vunpack.c.h.b16 %v259
    %v864 = vunpack.c.l.b16 %v260
    %v865 = vunpack.c.h.b16 %v260
    %v866 = vunpack.c.l.b16 %v261
    %v867 = vunpack.c.h.b16 %v261
    %v868 = vunpack.c.l.b16 %v262
    %v869 = vunpack.c.h.b16 %v262
    %v870 = vunpack.c.l.b16 %v263
    %v871 = vunpack.c.h.b16 %v263
    %v872 = vunpack.c.l.b16 %v264
    %v873 = vunpack.c.h.b16 %v264
    %v874 = vunpack.c.l.b16 %v265
    %v875 = vunpack.c.h.b16 %v265
    %v876 = vpack.c.b16 %v488, %v484
    %v877 = vpack.c.b16 %v489, %v485
    %v878 = vpack.c.b16 %v490, %v486
    %v879 = vpack.c.b16 %v491, %v487
    %v880 = vpack.c.b16 %v496, %v492
    %v881 = vpack.c.b16 %v497, %v493
    %v882 = vpack.c.b16 %v498, %v494
    %v883 = vpack.c.b16 %v499, %v495
    %v884 = vpack.c.b16 %v504, %v500
    %v885 = vpack.c.b16 %v505, %v501
    %v886 = vpack.c.b16 %v506, %v502
    %v887 = vpack.c.b16 %v507, %v503
    %v888 = vpack.c.b16 %v512, %v508
    %v889 = vpack.c.b16 %v513, %v509
    %v890 = vpack.c.b16 %v514, %v510
    %v891 = vpack.c.b16 %v515, %v511
    %v892 = vpack.c.b16 %v520, %v516
    %v893 = vpack.c.b16 %v521, %v517
    %v894 = vpack.c.b16 %v522, %v518
    %v895 = vpack.c.b16 %v523, %v519
    %v896 = vpack.c.b16 %v528, %v524
    %v897 = vpack.c.b16 %v529, %v525
    %v898 = vpack.c.b16 %v530, %v526
    %v899 = vpack.c.b16 %v531, %v527
    %v900 = vpack.c.b16 %v536, %v532
    %v901 = vpack.c.b16 %v537, %v533
    %v902 = vpack.c.b16 %v538, %v534
    %v903 = vpack.c.b16 %v539, %v535
    %v904 = vpack.c.b16 %v544, %v540
    %v905 = vpack.c.b16 %v545, %v541
    %v906 = vpack.c.b16 %v546, %v542
    %v907 = vpack.c.b16 %v547, %v543
    %v908 = vpack.c.b16 %v552, %v548
    %v909 = vpack.c.b16 %v553, %v549
    %v910 = vpack.c.b16 %v554, %v550
    %v911 = vpack.c.b16 %v555, %v551
    %v912 = vpack.c.b16 %v560, %v556
    %v913 = vpack.c.b16 %v561, %v557
    %v914 = vpack.c.b16 %v562, %v558
    %v915 = vpack.c.b16 %v563, %v559
    %v916 = vpack.c.b16 %v568, %v564
    %v917 = vpack.c.b16 %v569, %v565
    %v918 = vpack.c.b16 %v570, %v566
    %v919 = vpack.c.b16 %v571, %v567
    %v920 = vpack.c.b16 %v576, %v572
    %v921 = vpack.c.b16 %v577, %v573
    %v922 = vpack.c.b16 %v578, %v574
    %v923 = vpack.c.b16 %v579, %v575
    %v924 = vpack.c.b16 %v584, %v580
    %v925 = vpack.c.b16 %v585, %v581
    %v926 = vpack.c.b16 %v586, %v582
    %v927 = vpack.c.b16 %v587, %v583
    %v928 = vpack.c.b16 %v592, %v588
    %v929 = vpack.c.b16 %v593, %v589
    %v930 = vpack.c.b16 %v594, %v590
    %v931 = vpack.c.b16 %v595, %v591
    %v932 = vpack.c.b16 %v600, %v596
    %v933 = vpack.c.b16 %v601, %v597
    %v934 = vpack.c.b16 %v602, %v598
    %v935 = vpack.c.b16 %v603, %v599
    %v936 = vpack.c.b16 %v608, %v604
    %v937 = vpack.c.b16 %v609, %v605
    %v938 = vpack.c.b16 %v610, %v606
    %v939 = vpack.c.b16 %v611, %v607
    %v940 = vpack.c.b16 %v616, %v612
    %v941 = vpack.c.b16 %v617, %v613
    %v942 = vpack.c.b16 %v618, %v614
    %v943 = vpack.c.b16 %v619, %v615
    %v944 = vpack.c.b16 %v624, %v620
    %v945 = vpack.c.b16 %v625, %v621
    %v946 = vpack.c.b16 %v626, %v622
    %v947 = vpack.c.b16 %v627, %v623
    %v948 = vpack.c.b16 %v632, %v628
    %v949 = vpack.c.b16 %v633, %v629
    %v950 = vpack.c.b16 %v634, %v630
    %v951 = vpack.c.b16 %v635, %v631
    %v952 = vpack.c.b16 %v640, %v636
    %v953 = vpack.c.b16 %v641, %v637
    %v954 = vpack.c.b16 %v642, %v638
    %v955 = vpack.c.b16 %v643, %v639
    %v956 = vpack.c.b16 %v648, %v644
    %v957 = vpack.c.b16 %v649, %v645
    %v958 = vpack.c.b16 %v650, %v646
    %v959 = vpack.c.b16 %v651, %v647
    %v960 = vpack.c.b16 %v656, %v652
    %v961 = vpack.c.b16 %v657, %v653
    %v962 = vpack.c.b16 %v658, %v654
    %v963 = vpack.c.b16 %v659, %v655
    %v964 = vpack.c.b16 %v664, %v660
    %v965 = vpack.c.b16 %v665, %v661
    %v966 = vpack.c.b16 %v666, %v662
    %v967 = vpack.c.b16 %v667, %v663
    %v968 = vpack.c.b16 %v672, %v668
    %v969 = vpack.c.b16 %v673, %v669
    %v970 = vpack.c.b16 %v674, %v670
    %v971 = vpack.c.b16 %v675, %v671
    %v972 = vpack.c.b16 %v680, %v676
    %v973 = vpack.c.b16 %v681, %v677
    %v974 = vpack.c.b16 %v682, %v678
    %v975 = vpack.c.b16 %v683, %v679
    %v976 = vpack.c.b16 %v688, %v684
    %v977 = vpack.c.b16 %v689, %v685
    %v978 = vpack.c.b16 %v690, %v686
    %v979 = vpack.c.b16 %v691, %v687
    %v980 = vpack.c.b16 %v696, %v692
    %v981 = vpack.c.b16 %v697, %v693
    %v982 = vpack.c.b16 %v698, %v694
    %v983 = vpack.c.b16 %v699, %v695
    %v984 = vpack.c.b16 %v704, %v700
    %v985 = vpack.c.b16 %v705, %v701
    %v986 = vpack.c.b16 %v706, %v702
    %v987 = vpack.c.b16 %v707, %v703
    %v988 = vpack.c.b16 %v712, %v708
    %v989 = vpack.c.b16 %v713, %v709
    %v990 = vpack.c.b16 %v714, %v710
    %v991 = vpack.c.b16 %v715, %v711
    %v992 = vpack.c.b16 %v720, %v716
    %v993 = vpack.c.b16 %v721, %v717
    %v994 = vpack.c.b16 %v722, %v718
    %v995 = vpack.c.b16 %v723, %v719
    %v996 = vpack.c.b16 %v728, %v724
    %v997 = vpack.c.b16 %v729, %v725
    %v998 = vpack.c.b16 %v730, %v726
    %v999 = vpack.c.b16 %v731, %v727
    %v1000 = vpack.c.b16 %v736, %v732
    %v1001 = vpack.c.b16 %v737, %v733
    %v1002 = vpack.c.b16 %v738, %v734
    %v1003 = vpack.c.b16 %v739, %v735
    %v1004 = vpack.c.b16 %v744, %v740
    %v1005 = vpack.c.b16 %v745, %v741
    %v1006 = vpack.c.b16 %v746, %v742
    %v1007 = vpack.c.b16 %v747, %v743
    %v1008 = vpack.c.b16 %v752, %v748
    %v1009 = vpack.c.b16 %v753, %v749
    %v1010 = vpack.c.b16 %v754, %v750
    %v1011 = vpack.c.b16 %v755, %v751
    %v1012 = vpack.c.b16 %v760, %v756
    %v1013 = vpack.c.b16 %v761, %v757
    %v1014 = vpack.c.b16 %v762, %v758
    %v1015 = vpack.c.b16 %v763, %v759
    %v1016 = vpack.c.b16 %v768, %v764
    %v1017 = vpack.c.b16 %v769, %v765
    %v1018 = vpack.c.b16 %v770, %v766
    %v1019 = vpack.c.b16 %v771, %v767
    %v1020 = vpack.c.b16 %v776, %v772
    %v1021 = vpack.c.b16 %v777, %v773
    %v1022 = vpack.c.b16 %v778, %v774
    %v1023 = vpack.c.b16 %v779, %v775
    %v1024 = vpack.c.b16 %v784, %v780
    %v1025 = vpack.c.b16 %v785, %v781
    %v1026 = vpack.c.b16 %v786, %v782
    %v1027 = vpack.c.b16 %v787, %v783
    %v1028 = vpack.c.b16 %v792, %v788
    %v1029 = vpack.c.b16 %v793, %v789
    %v1030 = vpack.c.b16 %v794, %v790
    %v1031 = vpack.c.b16 %v795, %v791
    %v1032 = vpack.c.b16 %v800, %v796
    %v1033 = vpack.c.b16 %v801, %v797
    %v1034 = vpack.c.b16 %v802, %v798
    %v1035 = vpack.c.b16 %v803, %v799
    %v1036 = vpack.c.b16 %v808, %v804
    %v1037 = vpack.c.b16 %v809, %v805
    %v1038 = vpack.c.b16 %v810, %v806
    %v1039 = vpack.c.b16 %v811, %v807
    %v1040 = vpack.c.b16 %v816, %v812
    %v1041 = vpack.c.b16 %v817, %v813
    %v1042 = vpack.c.b16 %v818, %v814
    %v1043 = vpack.c.b16 %v819, %v815
    %v1044 = vpack.c.b16 %v824, %v820
    %v1045 = vpack.c.b16 %v825, %v821
    %v1046 = vpack.c.b16 %v826, %v822
    %v1047 = vpack.c.b16 %v827, %v823
    %v1048 = vpack.c.b16 %v832, %v828
    %v1049 = vpack.c.b16 %v833, %v829
    %v1050 = vpack.c.b16 %v834, %v830
    %v1051 = vpack.c.b16 %v835, %v831
    %v1052 = vpack.c.b16 %v840, %v836
    %v1053 = vpack.c.b16 %v841, %v837
    %v1054 = vpack.c.b16 %v842, %v838
    %v1055 = vpack.c.b16 %v843, %v839
    %v1056 = vpack.c.b16 %v848, %v844
    %v1057 = vpack.c.b16 %v849, %v845
    %v1058 = vpack.c.b16 %v850, %v846
    %v1059 = vpack.c.b16 %v851, %v847
    %v1060 = vpack.c.b16 %v856, %v852
    %v1061 = vpack.c.b16 %v857, %v853
    %v1062 = vpack.c.b16 %v858, %v854
    %v1063 = vpack.c.b16 %v859, %v855
    %v1064 = vpack.c.b16 %v864, %v860
    %v1065 = vpack.c.b16 %v865, %v861
    %v1066 = vpack.c.b16 %v866, %v862
    %v1067 = vpack.c.b16 %v867, %v863
    %v1068 = vpack.c.b16 %v872, %v868
    %v1069 = vpack.c.b16 %v873, %v869
    %v1070 = vpack.c.b16 %v874, %v870
    %v1071 = vpack.c.b16 %v875, %v871
    %vm1268 = vcmask 130048
    %v1270 = vsel %vm1268, %v69, 0
    %1272 = vmatprep.subr.bf16.mxu0 %v905
    %1273 = vmatpush1.bf16.msra.mxu0 %v904
    %1274 = vmatprep.subr.bf16.mxu0 %v901
    %1275 = vmatpush1.bf16.msra.mxu0 %v900
    %1276 = vmatprep.subr.bf16.mxu0 %v897
    %1277 = vmatpush1.bf16.msra.mxu0 %v896
    %1278 = vmatprep.subr.bf16.mxu0 %v893
    %1279 = vmatpush1.bf16.msra.mxu0 %v892
    %1280 = vmatprep.subr.bf16.mxu0 %v889
    %1281 = vmatpush1.bf16.msra.mxu0 %v888
    %1282 = vmatprep.subr.bf16.mxu0 %v885
    %1283 = vmatpush1.bf16.msra.mxu0 %v884
    %1284 = vmatprep.subr.bf16.mxu0 %v881
    %1285 = vmatpush1.bf16.msra.mxu0 %v880
    %1286 = vmatprep.subr.bf16.mxu0 %v877
    %1287 = vmatpush1.bf16.msra.mxu0 %v876
    %1288 = vmatprep.subr.bf16.mxu0 %v937
    %1289 = vmatpush2.bf16.msra.mxu0 %v936
    %1290 = vmatprep.subr.bf16.mxu0 %v933
    %1291 = vmatpush2.bf16.msra.mxu0 %v932
    %1292 = vmatprep.subr.bf16.mxu0 %v929
    %1293 = vmatpush2.bf16.msra.mxu0 %v928
    %1294 = vmatprep.subr.bf16.mxu0 %v925
    %1295 = vmatpush2.bf16.msra.mxu0 %v924
    %1296 = vmatprep.subr.bf16.mxu0 %v921
    %1297 = vmatpush2.bf16.msra.mxu0 %v920
    %1298 = vmatprep.subr.bf16.mxu0 %v917
    %1299 = vmatpush2.bf16.msra.mxu0 %v916
    %1300 = vmatprep.subr.bf16.mxu0 %v913
    %1301 = vmatpush2.bf16.msra.mxu0 %v912
    %1302 = vmatprep.subr.bf16.mxu0 %v909
    %1303 = vmatpush2.bf16.msra.mxu0 %v908
    %1304 = vmatprep.mubr.bf16.mxu0 %v64
    %1305 = vmatmul.mubr.bf16.gmra.mxu0 %v63
    %v1306 = vpop.f32.mrf.mxu0
    %v1307 = vadd.f32 %v271, %v1306
    %v1308 = vpop.f32.mrf.mxu0
    %v1309 = vadd.f32 %v275, %v1308
    %v1310 = vpop.f32.mrf.mxu0
    %v1311 = vpop.f32.mrf.mxu0
    %1312 = vdwg.mxu0
    %1313 = vmatprep.subr.bf16.mxu0 %v969
    %1314 = vmatpush1.bf16.msra.mxu0 %v968
    %1315 = vmatprep.subr.bf16.mxu0 %v965
    %1316 = vmatpush1.bf16.msra.mxu0 %v964
    %1317 = vmatprep.subr.bf16.mxu0 %v961
    %1318 = vmatpush1.bf16.msra.mxu0 %v960
    %1319 = vmatprep.subr.bf16.mxu0 %v957
    %1320 = vmatpush1.bf16.msra.mxu0 %v956
    %1321 = vmatprep.subr.bf16.mxu0 %v953
    %1322 = vmatpush1.bf16.msra.mxu0 %v952
    %1323 = vmatprep.subr.bf16.mxu0 %v949
    %1324 = vmatpush1.bf16.msra.mxu0 %v948
    %1325 = vmatprep.subr.bf16.mxu0 %v945
    %1326 = vmatpush1.bf16.msra.mxu0 %v944
    %1327 = vmatprep.subr.bf16.mxu0 %v941
    %1328 = vmatpush1.bf16.msra.mxu0 %v940
    %1329 = vmatprep.subr.bf16.mxu0 %v1001
    %1330 = vmatpush2.bf16.msra.mxu0 %v1000
    %1331 = vmatprep.subr.bf16.mxu0 %v997
    %1332 = vmatpush2.bf16.msra.mxu0 %v996
    %1333 = vmatprep.subr.bf16.mxu0 %v993
    %1334 = vmatpush2.bf16.msra.mxu0 %v992
    %1335 = vmatprep.subr.bf16.mxu0 %v989
    %1336 = vmatpush2.bf16.msra.mxu0 %v988
    %1337 = vmatprep.subr.bf16.mxu0 %v985
    %1338 = vmatpush2.bf16.msra.mxu0 %v984
    %1339 = vmatprep.subr.bf16.mxu0 %v981
    %1340 = vmatpush2.bf16.msra.mxu0 %v980
    %1341 = vmatprep.subr.bf16.mxu0 %v977
    %1342 = vmatpush2.bf16.msra.mxu0 %v976
    %1343 = vmatprep.subr.bf16.mxu0 %v973
    %1344 = vmatpush2.bf16.msra.mxu0 %v972
    %1345 = vmatprep.mubr.bf16.mxu0 %v66
    %1346 = vmatmul.mubr.bf16.gmra.mxu0 %v65
    %v1347 = vpop.f32.mrf.mxu0
    %v1348 = vadd.f32 %v1307, %v1347
    %v1349 = vpop.f32.mrf.mxu0
    %v1350 = vadd.f32 %v1309, %v1349
    %v1351 = vpop.f32.mrf.mxu0
    %v1352 = vpop.f32.mrf.mxu0
    %1353 = vdwg.mxu0
    %1354 = vmatprep.subr.bf16.mxu0 %v1033
    %1355 = vmatpush1.bf16.msra.mxu0 %v1032
    %1356 = vmatprep.subr.bf16.mxu0 %v1029
    %1357 = vmatpush1.bf16.msra.mxu0 %v1028
    %1358 = vmatprep.subr.bf16.mxu0 %v1025
    %1359 = vmatpush1.bf16.msra.mxu0 %v1024
    %1360 = vmatprep.subr.bf16.mxu0 %v1021
    %1361 = vmatpush1.bf16.msra.mxu0 %v1020
    %1362 = vmatprep.subr.bf16.mxu0 %v1017
    %1363 = vmatpush1.bf16.msra.mxu0 %v1016
    %1364 = vmatprep.subr.bf16.mxu0 %v1013
    %1365 = vmatpush1.bf16.msra.mxu0 %v1012
    %1366 = vmatprep.subr.bf16.mxu0 %v1009
    %1367 = vmatpush1.bf16.msra.mxu0 %v1008
    %1368 = vmatprep.subr.bf16.mxu0 %v1005
    %1369 = vmatpush1.bf16.msra.mxu0 %v1004
    %1370 = vmatprep.subr.bf16.mxu0 %v1065
    %1371 = vmatpush2.bf16.msra.mxu0 %v1064
    %1372 = vmatprep.subr.bf16.mxu0 %v1061
    %1373 = vmatpush2.bf16.msra.mxu0 %v1060
    %1374 = vmatprep.subr.bf16.mxu0 %v1057
    %1375 = vmatpush2.bf16.msra.mxu0 %v1056
    %1376 = vmatprep.subr.bf16.mxu0 %v1053
    %1377 = vmatpush2.bf16.msra.mxu0 %v1052
    %1378 = vmatprep.subr.bf16.mxu0 %v1049
    %1379 = vmatpush2.bf16.msra.mxu0 %v1048
    %1380 = vmatprep.subr.bf16.mxu0 %v1045
    %1381 = vmatpush2.bf16.msra.mxu0 %v1044
    %1382 = vmatprep.subr.bf16.mxu0 %v1041
    %1383 = vmatpush2.bf16.msra.mxu0 %v1040
    %1384 = vmatprep.subr.bf16.mxu0 %v1037
    %1385 = vmatpush2.bf16.msra.mxu0 %v1036
    %1386 = vmatprep.mubr.bf16.mxu0 %v68
    %1387 = vmatmul.mubr.bf16.gmra.mxu0 %v67
    %v1388 = vpop.f32.mrf.mxu0
    %v1389 = vadd.f32 %v1348, %v1388
    %v1390 = vpop.f32.mrf.mxu0
    %v1391 = vadd.f32 %v1350, %v1390
    %v1392 = vpop.f32.mrf.mxu0
    %v1393 = vpop.f32.mrf.mxu0
    %1394 = vdwg.mxu0
    %1395 = vmatprep.subr.bf16.mxu0 0
    %1396 = vmatpush1.bf16.msra.mxu0 0
    %1397 = vmatprep.subr.bf16.mxu0 0
    %1398 = vmatpush1.bf16.msra.mxu0 0
    %1399 = vmatprep.subr.bf16.mxu0 0
    %1400 = vmatpush1.bf16.msra.mxu0 0
    %1401 = vmatprep.subr.bf16.mxu0 0
    %1402 = vmatpush1.bf16.msra.mxu0 0
    %1403 = vmatprep.subr.bf16.mxu0 0
    %1404 = vmatpush1.bf16.msra.mxu0 0
    %1405 = vmatprep.subr.bf16.mxu0 0
    %1406 = vmatpush1.bf16.msra.mxu0 0
    %1407 = vmatprep.subr.bf16.mxu0 0
    %1408 = vmatpush1.bf16.msra.mxu0 0
    %1409 = vmatprep.subr.bf16.mxu0 %v1069
    %1410 = vmatpush1.bf16.msra.mxu0 %v1068
    %1411 = vmatprep.subr.bf16.mxu0 0
    %1412 = vmatpush2.bf16.msra.mxu0 0
    %1413 = vmatprep.subr.bf16.mxu0 0
    %1414 = vmatpush2.bf16.msra.mxu0 0
    %1415 = vmatprep.subr.bf16.mxu0 0
    %1416 = vmatpush2.bf16.msra.mxu0 0
    %1417 = vmatprep.subr.bf16.mxu0 0
    %1418 = vmatpush2.bf16.msra.mxu0 0
    %1419 = vmatprep.subr.bf16.mxu0 0
    %1420 = vmatpush2.bf16.msra.mxu0 0
    %1421 = vmatprep.subr.bf16.mxu0 0
    %1422 = vmatpush2.bf16.msra.mxu0 0
    %1423 = vmatprep.subr.bf16.mxu0 0
    %1424 = vmatpush2.bf16.msra.mxu0 0
    %1425 = vmatprep.subr.bf16.mxu0 0
    %1426 = vmatpush2.bf16.msra.mxu0 0
    %1427 = vmatprep.mubr.bf16.mxu0 0
    %1428 = vmatmul.mubr.bf16.gmra.mxu0 %v1270
    %v1429 = vpop.f32.mrf.mxu0
    %v1430 = vadd.f32 %v1389, %v1429
    %v1431 = vpop.f32.mrf.mxu0
    %v1432 = vadd.f32 %v1391, %v1431
    %v1433 = vpop.f32.mrf.mxu0
    %v1434 = vpop.f32.mrf.mxu0
    %1435 = vdwg.mxu0
    %1436 = vmatprep.subr.bf16.mxu0 %v907
    %1437 = vmatpush1.bf16.msra.mxu0 %v906
    %1438 = vmatprep.subr.bf16.mxu0 %v903
    %1439 = vmatpush1.bf16.msra.mxu0 %v902
    %1440 = vmatprep.subr.bf16.mxu0 %v899
    %1441 = vmatpush1.bf16.msra.mxu0 %v898
    %1442 = vmatprep.subr.bf16.mxu0 %v895
    %1443 = vmatpush1.bf16.msra.mxu0 %v894
    %1444 = vmatprep.subr.bf16.mxu0 %v891
    %1445 = vmatpush1.bf16.msra.mxu0 %v890
    %1446 = vmatprep.subr.bf16.mxu0 %v887
    %1447 = vmatpush1.bf16.msra.mxu0 %v886
    %1448 = vmatprep.subr.bf16.mxu0 %v883
    %1449 = vmatpush1.bf16.msra.mxu0 %v882
    %1450 = vmatprep.subr.bf16.mxu0 %v879
    %1451 = vmatpush1.bf16.msra.mxu0 %v878
    %1452 = vmatprep.subr.bf16.mxu0 %v939
    %1453 = vmatpush2.bf16.msra.mxu0 %v938
    %1454 = vmatprep.subr.bf16.mxu0 %v935
    %1455 = vmatpush2.bf16.msra.mxu0 %v934
    %1456 = vmatprep.subr.bf16.mxu0 %v931
    %1457 = vmatpush2.bf16.msra.mxu0 %v930
    %1458 = vmatprep.subr.bf16.mxu0 %v927
    %1459 = vmatpush2.bf16.msra.mxu0 %v926
    %1460 = vmatprep.subr.bf16.mxu0 %v923
    %1461 = vmatpush2.bf16.msra.mxu0 %v922
    %1462 = vmatprep.subr.bf16.mxu0 %v919
    %1463 = vmatpush2.bf16.msra.mxu0 %v918
    %1464 = vmatprep.subr.bf16.mxu0 %v915
    %1465 = vmatpush2.bf16.msra.mxu0 %v914
    %1466 = vmatprep.subr.bf16.mxu0 %v911
    %1467 = vmatpush2.bf16.msra.mxu0 %v910
    %1468 = vmatprep.mubr.bf16.mxu0 %v64
    %1469 = vmatmul.mubr.bf16.gmra.mxu0 %v63
    %v1470 = vpop.f32.mrf.mxu0
    %v1471 = vadd.f32 %v279, %v1470
    %v1472 = vpop.f32.mrf.mxu0
    %v1473 = vadd.f32 %v283, %v1472
    %v1474 = vpop.f32.mrf.mxu0
    %v1475 = vpop.f32.mrf.mxu0
    %1476 = vdwg.mxu0
    %1477 = vmatprep.subr.bf16.mxu0 %v971
    %1478 = vmatpush1.bf16.msra.mxu0 %v970
    %1479 = vmatprep.subr.bf16.mxu0 %v967
    %1480 = vmatpush1.bf16.msra.mxu0 %v966
    %1481 = vmatprep.subr.bf16.mxu0 %v963
    %1482 = vmatpush1.bf16.msra.mxu0 %v962
    %1483 = vmatprep.subr.bf16.mxu0 %v959
    %1484 = vmatpush1.bf16.msra.mxu0 %v958
    %1485 = vmatprep.subr.bf16.mxu0 %v955
    %1486 = vmatpush1.bf16.msra.mxu0 %v954
    %1487 = vmatprep.subr.bf16.mxu0 %v951
    %1488 = vmatpush1.bf16.msra.mxu0 %v950
    %1489 = vmatprep.subr.bf16.mxu0 %v947
    %1490 = vmatpush1.bf16.msra.mxu0 %v946
    %1491 = vmatprep.subr.bf16.mxu0 %v943
    %1492 = vmatpush1.bf16.msra.mxu0 %v942
    %1493 = vmatprep.subr.bf16.mxu0 %v1003
    %1494 = vmatpush2.bf16.msra.mxu0 %v1002
    %1495 = vmatprep.subr.bf16.mxu0 %v999
    %1496 = vmatpush2.bf16.msra.mxu0 %v998
    %1497 = vmatprep.subr.bf16.mxu0 %v995
    %1498 = vmatpush2.bf16.msra.mxu0 %v994
    %1499 = vmatprep.subr.bf16.mxu0 %v991
    %1500 = vmatpush2.bf16.msra.mxu0 %v990
    %1501 = vmatprep.subr.bf16.mxu0 %v987
    %1502 = vmatpush2.bf16.msra.mxu0 %v986
    %1503 = vmatprep.subr.bf16.mxu0 %v983
    %1504 = vmatpush2.bf16.msra.mxu0 %v982
    %1505 = vmatprep.subr.bf16.mxu0 %v979
    %1506 = vmatpush2.bf16.msra.mxu0 %v978
    %1507 = vmatprep.subr.bf16.mxu0 %v975
    %1508 = vmatpush2.bf16.msra.mxu0 %v974
    %1509 = vmatprep.mubr.bf16.mxu0 %v66
    %1510 = vmatmul.mubr.bf16.gmra.mxu0 %v65
    %v1511 = vpop.f32.mrf.mxu0
    %v1512 = vadd.f32 %v1471, %v1511
    %v1513 = vpop.f32.mrf.mxu0
    %v1514 = vadd.f32 %v1473, %v1513
    %v1515 = vpop.f32.mrf.mxu0
    %v1516 = vpop.f32.mrf.mxu0
    %1517 = vdwg.mxu0
    %1518 = vmatprep.subr.bf16.mxu0 %v1035
    %1519 = vmatpush1.bf16.msra.mxu0 %v1034
    %1520 = vmatprep.subr.bf16.mxu0 %v1031
    %1521 = vmatpush1.bf16.msra.mxu0 %v1030
    %1522 = vmatprep.subr.bf16.mxu0 %v1027
    %1523 = vmatpush1.bf16.msra.mxu0 %v1026
    %1524 = vmatprep.subr.bf16.mxu0 %v1023
    %1525 = vmatpush1.bf16.msra.mxu0 %v1022
    %1526 = vmatprep.subr.bf16.mxu0 %v1019
    %1527 = vmatpush1.bf16.msra.mxu0 %v1018
    %1528 = vmatprep.subr.bf16.mxu0 %v1015
    %1529 = vmatpush1.bf16.msra.mxu0 %v1014
    %1530 = vmatprep.subr.bf16.mxu0 %v1011
    %1531 = vmatpush1.bf16.msra.mxu0 %v1010
    %1532 = vmatprep.subr.bf16.mxu0 %v1007
    %1533 = vmatpush1.bf16.msra.mxu0 %v1006
    %1534 = vmatprep.subr.bf16.mxu0 %v1067
    %1535 = vmatpush2.bf16.msra.mxu0 %v1066
    %1536 = vmatprep.subr.bf16.mxu0 %v1063
    %1537 = vmatpush2.bf16.msra.mxu0 %v1062
    %1538 = vmatprep.subr.bf16.mxu0 %v1059
    %1539 = vmatpush2.bf16.msra.mxu0 %v1058
    %1540 = vmatprep.subr.bf16.mxu0 %v1055
    %1541 = vmatpush2.bf16.msra.mxu0 %v1054
    %1542 = vmatprep.subr.bf16.mxu0 %v1051
    %1543 = vmatpush2.bf16.msra.mxu0 %v1050
    %1544 = vmatprep.subr.bf16.mxu0 %v1047
    %1545 = vmatpush2.bf16.msra.mxu0 %v1046
    %1546 = vmatprep.subr.bf16.mxu0 %v1043
    %1547 = vmatpush2.bf16.msra.mxu0 %v1042
    %1548 = vmatprep.subr.bf16.mxu0 %v1039
    %1549 = vmatpush2.bf16.msra.mxu0 %v1038
    %1550 = vmatprep.mubr.bf16.mxu0 %v68
    %1551 = vmatmul.mubr.bf16.gmra.mxu0 %v67
    %v1552 = vpop.f32.mrf.mxu0
    %v1553 = vadd.f32 %v1512, %v1552
    %v1554 = vpop.f32.mrf.mxu0
    %v1555 = vadd.f32 %v1514, %v1554
    %v1556 = vpop.f32.mrf.mxu0
    %v1557 = vpop.f32.mrf.mxu0
    %1558 = vdwg.mxu0
    %1559 = vmatprep.subr.bf16.mxu0 0
    %1560 = vmatpush1.bf16.msra.mxu0 0
    %1561 = vmatprep.subr.bf16.mxu0 0
    %1562 = vmatpush1.bf16.msra.mxu0 0
    %1563 = vmatprep.subr.bf16.mxu0 0
    %1564 = vmatpush1.bf16.msra.mxu0 0
    %1565 = vmatprep.subr.bf16.mxu0 0
    %1566 = vmatpush1.bf16.msra.mxu0 0
    %1567 = vmatprep.subr.bf16.mxu0 0
    %1568 = vmatpush1.bf16.msra.mxu0 0
    %1569 = vmatprep.subr.bf16.mxu0 0
    %1570 = vmatpush1.bf16.msra.mxu0 0
    %1571 = vmatprep.subr.bf16.mxu0 0
    %1572 = vmatpush1.bf16.msra.mxu0 0
    %1573 = vmatprep.subr.bf16.mxu0 %v1071
    %1574 = vmatpush1.bf16.msra.mxu0 %v1070
    %1575 = vmatprep.subr.bf16.mxu0 0
    %1576 = vmatpush2.bf16.msra.mxu0 0
    %1577 = vmatprep.subr.bf16.mxu0 0
    %1578 = vmatpush2.bf16.msra.mxu0 0
    %1579 = vmatprep.subr.bf16.mxu0 0
    %1580 = vmatpush2.bf16.msra.mxu0 0
    %1581 = vmatprep.subr.bf16.mxu0 0
    %1582 = vmatpush2.bf16.msra.mxu0 0
    %1583 = vmatprep.subr.bf16.mxu0 0
    %1584 = vmatpush2.bf16.msra.mxu0 0
    %1585 = vmatprep.subr.bf16.mxu0 0
    %1586 = vmatpush2.bf16.msra.mxu0 0
    %1587 = vmatprep.subr.bf16.mxu0 0
    %1588 = vmatpush2.bf16.msra.mxu0 0
    %1589 = vmatprep.subr.bf16.mxu0 0
    %1590 = vmatpush2.bf16.msra.mxu0 0
    %1591 = vmatprep.mubr.bf16.mxu0 0
    %1592 = vmatmul.mubr.bf16.gmra.mxu0 %v1270
    %v1593 = vpop.f32.mrf.mxu0
    %v1594 = vadd.f32 %v1553, %v1593
    %v1595 = vpop.f32.mrf.mxu0
    %v1596 = vadd.f32 %v1555, %v1595
    %v1597 = vpop.f32.mrf.mxu0
    %v1598 = vpop.f32.mrf.mxu0
    %1599 = vdwg.mxu0
    %v1600 = vpack.c.bf16 %v1430, %v1430
    %v1601 = vpack.c.bf16 %v1432, %v1432
    %v1602 = vpack.c.bf16 %v1594, %v1594
    %v1603 = vpack.c.bf16 %v1596, %v1596
    %v1604 = vld [vmem:[#allocation5] sm:$0xff]
    %v1605 = vld [vmem:[#allocation5 + $0x8] sm:$0xff]
    %v1606 = vld [vmem:[#allocation5 + $0x10] sm:$0xff]
    %v1607 = vld [vmem:[#allocation5 + $0x18] sm:$0xff]
    %v1608 = vld [vmem:[#allocation5 + $0x20] sm:$0xff]
    %v1609 = vld [vmem:[#allocation5 + $0x28] sm:$0xff]
    %v1610 = vld [vmem:[#allocation5 + $0x30] sm:$0xff]
    %v1611 = vld [vmem:[#allocation5 + $0x38] sm:$0xff]
    %v1612 = vld [vmem:[#allocation5 + $0x40] sm:$0xff]
    %v1613 = vld [vmem:[#allocation5 + $0x48] sm:$0xff]
    %v1614 = vld [vmem:[#allocation5 + $0x50] sm:$0xff]
    %v1615 = vld [vmem:[#allocation5 + $0x58] sm:$0xff]
    %v1616 = vld [vmem:[#allocation5 + $0x60] sm:$0xff]
    %v1617 = vld [vmem:[#allocation5 + $0x68] sm:$0xff]
    %v1618 = vld [vmem:[#allocation5 + $0x70] sm:$0xff]
    %v1619 = vld [vmem:[#allocation5 + $0x78] sm:$0xff]
    %v1620 = vld [vmem:[#allocation5 + $0x80] sm:$0xff]
    %v1621 = vld [vmem:[#allocation5 + $0x88] sm:$0xff]
    %v1622 = vld [vmem:[#allocation5 + $0x90] sm:$0xff]
    %v1623 = vld [vmem:[#allocation5 + $0x98] sm:$0xff]
    %v1624 = vld [vmem:[#allocation5 + $0xa0] sm:$0xff]
    %v1625 = vld [vmem:[#allocation5 + $0xa8] sm:$0xff]
    %v1626 = vld [vmem:[#allocation5 + $0xb0] sm:$0xff]
    %v1627 = vld [vmem:[#allocation5 + $0xb8] sm:$0xff]
    %v1628 = vld [vmem:[#allocation5 + $0xc0] sm:$0xff]
    %v1629 = vld [vmem:[#allocation5 + $0xc8] sm:$0xff]
    %v1630 = vld [vmem:[#allocation5 + $0xd0] sm:$0xff]
    %v1631 = vld [vmem:[#allocation5 + $0xd8] sm:$0xff]
    %v1632 = vld [vmem:[#allocation5 + $0xe0] sm:$0xff]
    %v1633 = vld [vmem:[#allocation5 + $0xe8] sm:$0xff]
    %v1634 = vld [vmem:[#allocation5 + $0xf0] sm:$0xff]
    %v1635 = vld [vmem:[#allocation5 + $0xf8] sm:$0xff]
    %v1636 = vld [vmem:[#allocation5 + $0x100] sm:$0xff]
    %v1637 = vld [vmem:[#allocation5 + $0x108] sm:$0xff]
    %v1638 = vld [vmem:[#allocation5 + $0x110] sm:$0xff]
    %v1639 = vld [vmem:[#allocation5 + $0x118] sm:$0xff]
    %v1640 = vld [vmem:[#allocation5 + $0x120] sm:$0xff]
    %v1641 = vld [vmem:[#allocation5 + $0x128] sm:$0xff]
    %v1642 = vld [vmem:[#allocation5 + $0x130] sm:$0xff]
    %v1643 = vld [vmem:[#allocation5 + $0x138] sm:$0xff]
    %v1644 = vld [vmem:[#allocation5 + $0x140] sm:$0xff]
    %v1645 = vld [vmem:[#allocation5 + $0x148] sm:$0xff]
    %v1646 = vld [vmem:[#allocation5 + $0x150] sm:$0xff]
    %v1647 = vld [vmem:[#allocation5 + $0x158] sm:$0xff]
    %v1648 = vld [vmem:[#allocation5 + $0x160] sm:$0xff]
    %v1649 = vld [vmem:[#allocation5 + $0x168] sm:$0xff]
    %v1650 = vld [vmem:[#allocation5 + $0x170] sm:$0xff]
    %v1651 = vld [vmem:[#allocation5 + $0x178] sm:$0xff]
    %v1652 = vld [vmem:[#allocation5 + $0x180] sm:$0xff]
    %v1653 = vld [vmem:[#allocation5 + $0x188] sm:$0xff]
    %v1654 = vld [vmem:[#allocation5 + $0x190] sm:$0xff]
    %v1655 = vld [vmem:[#allocation5 + $0x198] sm:$0xff]
    %v1656 = vld [vmem:[#allocation5 + $0x1a0] sm:$0xff]
    %v1657 = vld [vmem:[#allocation5 + $0x1a8] sm:$0xff]
    %v1658 = vld [vmem:[#allocation5 + $0x1b0] sm:$0xff]
    %v1659 = vld [vmem:[#allocation5 + $0x1b8] sm:$0xff]
    %v1660 = vld [vmem:[#allocation5 + $0x1c0] sm:$0xff]
    %v1661 = vld [vmem:[#allocation5 + $0x1c8] sm:$0xff]
    %v1662 = vld [vmem:[#allocation5 + $0x1d0] sm:$0xff]
    %v1663 = vld [vmem:[#allocation5 + $0x1d8] sm:$0xff]
    %v1664 = vld [vmem:[#allocation5 + $0x1e0] sm:$0xff]
    %v1665 = vld [vmem:[#allocation5 + $0x1e8] sm:$0xff]
    %v1666 = vld [vmem:[#allocation5 + $0x1f0] sm:$0xff]
    %v1667 = vld [vmem:[#allocation5 + $0x1f8] sm:$0xff]
    %v1668 = vld [vmem:[#allocation5 + $0x200] sm:$0xff]
    %v1669 = vld [vmem:[#allocation5 + $0x208] sm:$0xff]
    %v1670 = vld [vmem:[#allocation5 + $0x210] sm:$0xff]
    %v1671 = vld [vmem:[#allocation5 + $0x218] sm:$0xff]
    %v1672 = vld [vmem:[#allocation5 + $0x220] sm:$0xff]
    %v1673 = vld [vmem:[#allocation5 + $0x228] sm:$0xff]
    %v1674 = vld [vmem:[#allocation5 + $0x230] sm:$0xff]
    %v1675 = vld [vmem:[#allocation5 + $0x238] sm:$0xff]
    %v1676 = vld [vmem:[#allocation5 + $0x240] sm:$0xff]
    %v1677 = vld [vmem:[#allocation5 + $0x248] sm:$0xff]
    %v1678 = vld [vmem:[#allocation5 + $0x250] sm:$0xff]
    %v1679 = vld [vmem:[#allocation5 + $0x258] sm:$0xff]
    %v1680 = vld [vmem:[#allocation5 + $0x260] sm:$0xff]
    %v1681 = vld [vmem:[#allocation5 + $0x268] sm:$0xff]
    %v1682 = vld [vmem:[#allocation5 + $0x270] sm:$0xff]
    %v1683 = vld [vmem:[#allocation5 + $0x278] sm:$0xff]
    %v1684 = vld [vmem:[#allocation5 + $0x280] sm:$0xff]
    %v1685 = vld [vmem:[#allocation5 + $0x288] sm:$0xff]
    %v1686 = vld [vmem:[#allocation5 + $0x290] sm:$0xff]
    %v1687 = vld [vmem:[#allocation5 + $0x298] sm:$0xff]
    %v1688 = vld [vmem:[#allocation5 + $0x2a0] sm:$0xff]
    %v1689 = vld [vmem:[#allocation5 + $0x2a8] sm:$0xff]
    %v1690 = vld [vmem:[#allocation5 + $0x2b0] sm:$0xff]
    %v1691 = vld [vmem:[#allocation5 + $0x2b8] sm:$0xff]
    %v1692 = vld [vmem:[#allocation5 + $0x2c0] sm:$0xff]
    %v1693 = vld [vmem:[#allocation5 + $0x2c8] sm:$0xff]
    %v1694 = vld [vmem:[#allocation5 + $0x2d0] sm:$0xff]
    %v1695 = vld [vmem:[#allocation5 + $0x2d8] sm:$0xff]
    %v1696 = vld [vmem:[#allocation5 + $0x2e0] sm:$0xff]
    %v1697 = vld [vmem:[#allocation5 + $0x2e8] sm:$0xff]
    %v1698 = vld [vmem:[#allocation5 + $0x2f0] sm:$0xff]
    %v1699 = vld [vmem:[#allocation5 + $0x2f8] sm:$0xff]
    %v1700 = vld [vmem:[#allocation5 + $0x300] sm:$0xff]
    %v1701 = vld [vmem:[#allocation5 + $0x308] sm:$0xff]
    %v1702 = vld [vmem:[#allocation5 + $0x310] sm:$0xff]
    %v1703 = vld [vmem:[#allocation5 + $0x318] sm:$0xff]
    %v1704 = vld [vmem:[#allocation5 + $0x320] sm:$0xff]
    %v1705 = vld [vmem:[#allocation5 + $0x328] sm:$0xff]
    %v1706 = vld [vmem:[#allocation5 + $0x330] sm:$0xff]
    %v1707 = vld [vmem:[#allocation5 + $0x338] sm:$0xff]
    %v1708 = vld [vmem:[#allocation5 + $0x340] sm:$0xff]
    %v1709 = vld [vmem:[#allocation5 + $0x348] sm:$0xff]
    %v1710 = vld [vmem:[#allocation5 + $0x350] sm:$0xff]
    %v1711 = vld [vmem:[#allocation5 + $0x358] sm:$0xff]
    %v1712 = vld [vmem:[#allocation5 + $0x360] sm:$0xff]
    %v1713 = vld [vmem:[#allocation5 + $0x368] sm:$0xff]
    %v1714 = vld [vmem:[#allocation5 + $0x370] sm:$0xff]
    %v1715 = vld [vmem:[#allocation5 + $0x378] sm:$0xff]
    %v1716 = vld [vmem:[#allocation5 + $0x380] sm:$0xff]
    %v1717 = vld [vmem:[#allocation5 + $0x388] sm:$0xff]
    %v1718 = vld [vmem:[#allocation5 + $0x390] sm:$0xff]
    %v1719 = vld [vmem:[#allocation5 + $0x398] sm:$0xff]
    %v1720 = vld [vmem:[#allocation5 + $0x3a0] sm:$0xff]
    %v1721 = vld [vmem:[#allocation5 + $0x3a8] sm:$0xff]
    %v1722 = vld [vmem:[#allocation5 + $0x3b0] sm:$0xff]
    %v1723 = vld [vmem:[#allocation5 + $0x3b8] sm:$0xff]
    %v1724 = vld [vmem:[#allocation5 + $0x3c0] sm:$0xff]
    %v1725 = vld [vmem:[#allocation5 + $0x3c8] sm:$0xff]
    %v1726 = vld [vmem:[#allocation5 + $0x3d0] sm:$0xff]
    %v1727 = vld [vmem:[#allocation5 + $0x3d8] sm:$0xff]
    %v1728 = vld [vmem:[#allocation5 + $0x3e0] sm:$0xff]
    %v1729 = vld [vmem:[#allocation5 + $0x3e8] sm:$0xff]
    %v1730 = vld [vmem:[#allocation5 + $0x3f0] sm:$0xff]
    %v1731 = vld [vmem:[#allocation5 + $0x3f8] sm:$0xff]
    %v1732 = vld [vmem:[%s4] sm:$0xf]
    %v1734 = vlaneseq
    %v1735 = vshrl.u32 %v1734, 7
    %v1736 = vsub.s32 0, %v1735
    %v1737 = vrot.slane %v1732, %v1736
    %v1738 = vlaneseq
    %v1739 = vshrl.u32 %v1738, 7
    %v1740 = vsub.s32 1, %v1739
    %v1741 = vrot.slane %v1732, %v1740
    %v1742 = vlaneseq
    %v1743 = vshrl.u32 %v1742, 7
    %v1744 = vsub.s32 2, %v1743
    %v1745 = vrot.slane %v1732, %v1744
    %v1746 = vlaneseq
    %v1747 = vshrl.u32 %v1746, 7
    %v1748 = vsub.s32 3, %v1747
    %v1749 = vrot.slane %v1732, %v1748
    %v1882 = vunpack.c.l.b16 %v1604
    %v1883 = vunpack.c.h.b16 %v1604
    %v1884 = vunpack.c.l.b16 %v1605
    %v1885 = vunpack.c.h.b16 %v1605
    %v1886 = vunpack.c.l.b16 %v1606
    %v1887 = vunpack.c.h.b16 %v1606
    %v1888 = vunpack.c.l.b16 %v1607
    %v1889 = vunpack.c.h.b16 %v1607
    %v1890 = vunpack.c.l.b16 %v1608
    %v1891 = vunpack.c.h.b16 %v1608
    %v1892 = vunpack.c.l.b16 %v1609
    %v1893 = vunpack.c.h.b16 %v1609
    %v1894 = vunpack.c.l.b16 %v1610
    %v1895 = vunpack.c.h.b16 %v1610
    %v1896 = vunpack.c.l.b16 %v1611
    %v1897 = vunpack.c.h.b16 %v1611
    %v1898 = vunpack.c.l.b16 %v1612
    %v1899 = vunpack.c.h.b16 %v1612
    %v1900 = vunpack.c.l.b16 %v1613
    %v1901 = vunpack.c.h.b16 %v1613
    %v1902 = vunpack.c.l.b16 %v1614
    %v1903 = vunpack.c.h.b16 %v1614
    %v1904 = vunpack.c.l.b16 %v1615
    %v1905 = vunpack.c.h.b16 %v1615
    %v1906 = vunpack.c.l.b16 %v1616
    %v1907 = vunpack.c.h.b16 %v1616
    %v1908 = vunpack.c.l.b16 %v1617
    %v1909 = vunpack.c.h.b16 %v1617
    %v1910 = vunpack.c.l.b16 %v1618
    %v1911 = vunpack.c.h.b16 %v1618
    %v1912 = vunpack.c.l.b16 %v1619
    %v1913 = vunpack.c.h.b16 %v1619
    %v1914 = vunpack.c.l.b16 %v1620
    %v1915 = vunpack.c.h.b16 %v1620
    %v1916 = vunpack.c.l.b16 %v1621
    %v1917 = vunpack.c.h.b16 %v1621
    %v1918 = vunpack.c.l.b16 %v1622
    %v1919 = vunpack.c.h.b16 %v1622
    %v1920 = vunpack.c.l.b16 %v1623
    %v1921 = vunpack.c.h.b16 %v1623
    %v1922 = vunpack.c.l.b16 %v1624
    %v1923 = vunpack.c.h.b16 %v1624
    %v1924 = vunpack.c.l.b16 %v1625
    %v1925 = vunpack.c.h.b16 %v1625
    %v1926 = vunpack.c.l.b16 %v1626
    %v1927 = vunpack.c.h.b16 %v1626
    %v1928 = vunpack.c.l.b16 %v1627
    %v1929 = vunpack.c.h.b16 %v1627
    %v1930 = vunpack.c.l.b16 %v1628
    %v1931 = vunpack.c.h.b16 %v1628
    %v1932 = vunpack.c.l.b16 %v1629
    %v1933 = vunpack.c.h.b16 %v1629
    %v1934 = vunpack.c.l.b16 %v1630
    %v1935 = vunpack.c.h.b16 %v1630
    %v1936 = vunpack.c.l.b16 %v1631
    %v1937 = vunpack.c.h.b16 %v1631
    %v1938 = vunpack.c.l.b16 %v1632
    %v1939 = vunpack.c.h.b16 %v1632
    %v1940 = vunpack.c.l.b16 %v1633
    %v1941 = vunpack.c.h.b16 %v1633
    %v1942 = vunpack.c.l.b16 %v1634
    %v1943 = vunpack.c.h.b16 %v1634
    %v1944 = vunpack.c.l.b16 %v1635
    %v1945 = vunpack.c.h.b16 %v1635
    %v1946 = vunpack.c.l.b16 %v1636
    %v1947 = vunpack.c.h.b16 %v1636
    %v1948 = vunpack.c.l.b16 %v1637
    %v1949 = vunpack.c.h.b16 %v1637
    %v1950 = vunpack.c.l.b16 %v1638
    %v1951 = vunpack.c.h.b16 %v1638
    %v1952 = vunpack.c.l.b16 %v1639
    %v1953 = vunpack.c.h.b16 %v1639
    %v1954 = vunpack.c.l.b16 %v1640
    %v1955 = vunpack.c.h.b16 %v1640
    %v1956 = vunpack.c.l.b16 %v1641
    %v1957 = vunpack.c.h.b16 %v1641
    %v1958 = vunpack.c.l.b16 %v1642
    %v1959 = vunpack.c.h.b16 %v1642
    %v1960 = vunpack.c.l.b16 %v1643
    %v1961 = vunpack.c.h.b16 %v1643
    %v1962 = vunpack.c.l.b16 %v1644
    %v1963 = vunpack.c.h.b16 %v1644
    %v1964 = vunpack.c.l.b16 %v1645
    %v1965 = vunpack.c.h.b16 %v1645
    %v1966 = vunpack.c.l.b16 %v1646
    %v1967 = vunpack.c.h.b16 %v1646
    %v1968 = vunpack.c.l.b16 %v1647
    %v1969 = vunpack.c.h.b16 %v1647
    %v1970 = vunpack.c.l.b16 %v1648
    %v1971 = vunpack.c.h.b16 %v1648
    %v1972 = vunpack.c.l.b16 %v1649
    %v1973 = vunpack.c.h.b16 %v1649
    %v1974 = vunpack.c.l.b16 %v1650
    %v1975 = vunpack.c.h.b16 %v1650
    %v1976 = vunpack.c.l.b16 %v1651
    %v1977 = vunpack.c.h.b16 %v1651
    %v1978 = vunpack.c.l.b16 %v1652
    %v1979 = vunpack.c.h.b16 %v1652
    %v1980 = vunpack.c.l.b16 %v1653
    %v1981 = vunpack.c.h.b16 %v1653
    %v1982 = vunpack.c.l.b16 %v1654
    %v1983 = vunpack.c.h.b16 %v1654
    %v1984 = vunpack.c.l.b16 %v1655
    %v1985 = vunpack.c.h.b16 %v1655
    %v1986 = vunpack.c.l.b16 %v1656
    %v1987 = vunpack.c.h.b16 %v1656
    %v1988 = vunpack.c.l.b16 %v1657
    %v1989 = vunpack.c.h.b16 %v1657
    %v1990 = vunpack.c.l.b16 %v1658
    %v1991 = vunpack.c.h.b16 %v1658
    %v1992 = vunpack.c.l.b16 %v1659
    %v1993 = vunpack.c.h.b16 %v1659
    %v1994 = vunpack.c.l.b16 %v1660
    %v1995 = vunpack.c.h.b16 %v1660
    %v1996 = vunpack.c.l.b16 %v1661
    %v1997 = vunpack.c.h.b16 %v1661
    %v1998 = vunpack.c.l.b16 %v1662
    %v1999 = vunpack.c.h.b16 %v1662
    %v2000 = vunpack.c.l.b16 %v1663
    %v2001 = vunpack.c.h.b16 %v1663
    %v2002 = vunpack.c.l.b16 %v1664
    %v2003 = vunpack.c.h.b16 %v1664
    %v2004 = vunpack.c.l.b16 %v1665
    %v2005 = vunpack.c.h.b16 %v1665
    %v2006 = vunpack.c.l.b16 %v1666
    %v2007 = vunpack.c.h.b16 %v1666
    %v2008 = vunpack.c.l.b16 %v1667
    %v2009 = vunpack.c.h.b16 %v1667
    %v2010 = vunpack.c.l.b16 %v1668
    %v2011 = vunpack.c.h.b16 %v1668
    %v2012 = vunpack.c.l.b16 %v1669
    %v2013 = vunpack.c.h.b16 %v1669
    %v2014 = vunpack.c.l.b16 %v1670
    %v2015 = vunpack.c.h.b16 %v1670
    %v2016 = vunpack.c.l.b16 %v1671
    %v2017 = vunpack.c.h.b16 %v1671
    %v2018 = vunpack.c.l.b16 %v1672
    %v2019 = vunpack.c.h.b16 %v1672
    %v2020 = vunpack.c.l.b16 %v1673
    %v2021 = vunpack.c.h.b16 %v1673
    %v2022 = vunpack.c.l.b16 %v1674
    %v2023 = vunpack.c.h.b16 %v1674
    %v2024 = vunpack.c.l.b16 %v1675
    %v2025 = vunpack.c.h.b16 %v1675
    %v2026 = vunpack.c.l.b16 %v1676
    %v2027 = vunpack.c.h.b16 %v1676
    %v2028 = vunpack.c.l.b16 %v1677
    %v2029 = vunpack.c.h.b16 %v1677
    %v2030 = vunpack.c.l.b16 %v1678
    %v2031 = vunpack.c.h.b16 %v1678
    %v2032 = vunpack.c.l.b16 %v1679
    %v2033 = vunpack.c.h.b16 %v1679
    %v2034 = vunpack.c.l.b16 %v1680
    %v2035 = vunpack.c.h.b16 %v1680
    %v2036 = vunpack.c.l.b16 %v1681
    %v2037 = vunpack.c.h.b16 %v1681
    %v2038 = vunpack.c.l.b16 %v1682
    %v2039 = vunpack.c.h.b16 %v1682
    %v2040 = vunpack.c.l.b16 %v1683
    %v2041 = vunpack.c.h.b16 %v1683
    %v2042 = vunpack.c.l.b16 %v1684
    %v2043 = vunpack.c.h.b16 %v1684
    %v2044 = vunpack.c.l.b16 %v1685
    %v2045 = vunpack.c.h.b16 %v1685
    %v2046 = vunpack.c.l.b16 %v1686
    %v2047 = vunpack.c.h.b16 %v1686
    %v2048 = vunpack.c.l.b16 %v1687
    %v2049 = vunpack.c.h.b16 %v1687
    %v2050 = vunpack.c.l.b16 %v1688
    %v2051 = vunpack.c.h.b16 %v1688
    %v2052 = vunpack.c.l.b16 %v1689
    %v2053 = vunpack.c.h.b16 %v1689
    %v2054 = vunpack.c.l.b16 %v1690
    %v2055 = vunpack.c.h.b16 %v1690
    %v2056 = vunpack.c.l.b16 %v1691
    %v2057 = vunpack.c.h.b16 %v1691
    %v2058 = vunpack.c.l.b16 %v1692
    %v2059 = vunpack.c.h.b16 %v1692
    %v2060 = vunpack.c.l.b16 %v1693
    %v2061 = vunpack.c.h.b16 %v1693
    %v2062 = vunpack.c.l.b16 %v1694
    %v2063 = vunpack.c.h.b16 %v1694
    %v2064 = vunpack.c.l.b16 %v1695
    %v2065 = vunpack.c.h.b16 %v1695
    %v2066 = vunpack.c.l.b16 %v1696
    %v2067 = vunpack.c.h.b16 %v1696
    %v2068 = vunpack.c.l.b16 %v1697
    %v2069 = vunpack.c.h.b16 %v1697
    %v2070 = vunpack.c.l.b16 %v1698
    %v2071 = vunpack.c.h.b16 %v1698
    %v2072 = vunpack.c.l.b16 %v1699
    %v2073 = vunpack.c.h.b16 %v1699
    %v2074 = vunpack.c.l.b16 %v1700
    %v2075 = vunpack.c.h.b16 %v1700
    %v2076 = vunpack.c.l.b16 %v1701
    %v2077 = vunpack.c.h.b16 %v1701
    %v2078 = vunpack.c.l.b16 %v1702
    %v2079 = vunpack.c.h.b16 %v1702
    %v2080 = vunpack.c.l.b16 %v1703
    %v2081 = vunpack.c.h.b16 %v1703
    %v2082 = vunpack.c.l.b16 %v1704
    %v2083 = vunpack.c.h.b16 %v1704
    %v2084 = vunpack.c.l.b16 %v1705
    %v2085 = vunpack.c.h.b16 %v1705
    %v2086 = vunpack.c.l.b16 %v1706
    %v2087 = vunpack.c.h.b16 %v1706
    %v2088 = vunpack.c.l.b16 %v1707
    %v2089 = vunpack.c.h.b16 %v1707
    %v2090 = vunpack.c.l.b16 %v1708
    %v2091 = vunpack.c.h.b16 %v1708
    %v2092 = vunpack.c.l.b16 %v1709
    %v2093 = vunpack.c.h.b16 %v1709
    %v2094 = vunpack.c.l.b16 %v1710
    %v2095 = vunpack.c.h.b16 %v1710
    %v2096 = vunpack.c.l.b16 %v1711
    %v2097 = vunpack.c.h.b16 %v1711
    %v2098 = vunpack.c.l.b16 %v1712
    %v2099 = vunpack.c.h.b16 %v1712
    %v2100 = vunpack.c.l.b16 %v1713
    %v2101 = vunpack.c.h.b16 %v1713
    %v2102 = vunpack.c.l.b16 %v1714
    %v2103 = vunpack.c.h.b16 %v1714
    %v2104 = vunpack.c.l.b16 %v1715
    %v2105 = vunpack.c.h.b16 %v1715
    %v2106 = vunpack.c.l.b16 %v1716
    %v2107 = vunpack.c.h.b16 %v1716
    %v2108 = vunpack.c.l.b16 %v1717
    %v2109 = vunpack.c.h.b16 %v1717
    %v2110 = vunpack.c.l.b16 %v1718
    %v2111 = vunpack.c.h.b16 %v1718
    %v2112 = vunpack.c.l.b16 %v1719
    %v2113 = vunpack.c.h.b16 %v1719
    %v2114 = vunpack.c.l.b16 %v1720
    %v2115 = vunpack.c.h.b16 %v1720
    %v2116 = vunpack.c.l.b16 %v1721
    %v2117 = vunpack.c.h.b16 %v1721
    %v2118 = vunpack.c.l.b16 %v1722
    %v2119 = vunpack.c.h.b16 %v1722
    %v2120 = vunpack.c.l.b16 %v1723
    %v2121 = vunpack.c.h.b16 %v1723
    %v2122 = vunpack.c.l.b16 %v1724
    %v2123 = vunpack.c.h.b16 %v1724
    %v2124 = vunpack.c.l.b16 %v1725
    %v2125 = vunpack.c.h.b16 %v1725
    %v2126 = vunpack.c.l.b16 %v1726
    %v2127 = vunpack.c.h.b16 %v1726
    %v2128 = vunpack.c.l.b16 %v1727
    %v2129 = vunpack.c.h.b16 %v1727
    %v2130 = vunpack.c.l.b16 %v1728
    %v2131 = vunpack.c.h.b16 %v1728
    %v2132 = vunpack.c.l.b16 %v1729
    %v2133 = vunpack.c.h.b16 %v1729
    %v2134 = vunpack.c.l.b16 %v1730
    %v2135 = vunpack.c.h.b16 %v1730
    %v2136 = vunpack.c.l.b16 %v1731
    %v2137 = vunpack.c.h.b16 %v1731
    %v2138 = vpack.c.b16 %v1886, %v1882
    %v2139 = vpack.c.b16 %v1887, %v1883
    %v2140 = vpack.c.b16 %v1888, %v1884
    %v2141 = vpack.c.b16 %v1889, %v1885
    %v2142 = vpack.c.b16 %v1894, %v1890
    %v2143 = vpack.c.b16 %v1895, %v1891
    %v2144 = vpack.c.b16 %v1896, %v1892
    %v2145 = vpack.c.b16 %v1897, %v1893
    %v2146 = vpack.c.b16 %v1902, %v1898
    %v2147 = vpack.c.b16 %v1903, %v1899
    %v2148 = vpack.c.b16 %v1904, %v1900
    %v2149 = vpack.c.b16 %v1905, %v1901
    %v2150 = vpack.c.b16 %v1910, %v1906
    %v2151 = vpack.c.b16 %v1911, %v1907
    %v2152 = vpack.c.b16 %v1912, %v1908
    %v2153 = vpack.c.b16 %v1913, %v1909
    %v2154 = vpack.c.b16 %v1918, %v1914
    %v2155 = vpack.c.b16 %v1919, %v1915
    %v2156 = vpack.c.b16 %v1920, %v1916
    %v2157 = vpack.c.b16 %v1921, %v1917
    %v2158 = vpack.c.b16 %v1926, %v1922
    %v2159 = vpack.c.b16 %v1927, %v1923
    %v2160 = vpack.c.b16 %v1928, %v1924
    %v2161 = vpack.c.b16 %v1929, %v1925
    %v2162 = vpack.c.b16 %v1934, %v1930
    %v2163 = vpack.c.b16 %v1935, %v1931
    %v2164 = vpack.c.b16 %v1936, %v1932
    %v2165 = vpack.c.b16 %v1937, %v1933
    %v2166 = vpack.c.b16 %v1942, %v1938
    %v2167 = vpack.c.b16 %v1943, %v1939
    %v2168 = vpack.c.b16 %v1944, %v1940
    %v2169 = vpack.c.b16 %v1945, %v1941
    %v2170 = vpack.c.b16 %v1950, %v1946
    %v2171 = vpack.c.b16 %v1951, %v1947
    %v2172 = vpack.c.b16 %v1952, %v1948
    %v2173 = vpack.c.b16 %v1953, %v1949
    %v2174 = vpack.c.b16 %v1958, %v1954
    %v2175 = vpack.c.b16 %v1959, %v1955
    %v2176 = vpack.c.b16 %v1960, %v1956
    %v2177 = vpack.c.b16 %v1961, %v1957
    %v2178 = vpack.c.b16 %v1966, %v1962
    %v2179 = vpack.c.b16 %v1967, %v1963
    %v2180 = vpack.c.b16 %v1968, %v1964
    %v2181 = vpack.c.b16 %v1969, %v1965
    %v2182 = vpack.c.b16 %v1974, %v1970
    %v2183 = vpack.c.b16 %v1975, %v1971
    %v2184 = vpack.c.b16 %v1976, %v1972
    %v2185 = vpack.c.b16 %v1977, %v1973
    %v2186 = vpack.c.b16 %v1982, %v1978
    %v2187 = vpack.c.b16 %v1983, %v1979
    %v2188 = vpack.c.b16 %v1984, %v1980
    %v2189 = vpack.c.b16 %v1985, %v1981
    %v2190 = vpack.c.b16 %v1990, %v1986
    %v2191 = vpack.c.b16 %v1991, %v1987
    %v2192 = vpack.c.b16 %v1992, %v1988
    %v2193 = vpack.c.b16 %v1993, %v1989
    %v2194 = vpack.c.b16 %v1998, %v1994
    %v2195 = vpack.c.b16 %v1999, %v1995
    %v2196 = vpack.c.b16 %v2000, %v1996
    %v2197 = vpack.c.b16 %v2001, %v1997
    %v2198 = vpack.c.b16 %v2006, %v2002
    %v2199 = vpack.c.b16 %v2007, %v2003
    %v2200 = vpack.c.b16 %v2008, %v2004
    %v2201 = vpack.c.b16 %v2009, %v2005
    %v2202 = vpack.c.b16 %v2014, %v2010
    %v2203 = vpack.c.b16 %v2015, %v2011
    %v2204 = vpack.c.b16 %v2016, %v2012
    %v2205 = vpack.c.b16 %v2017, %v2013
    %v2206 = vpack.c.b16 %v2022, %v2018
    %v2207 = vpack.c.b16 %v2023, %v2019
    %v2208 = vpack.c.b16 %v2024, %v2020
    %v2209 = vpack.c.b16 %v2025, %v2021
    %v2210 = vpack.c.b16 %v2030, %v2026
    %v2211 = vpack.c.b16 %v2031, %v2027
    %v2212 = vpack.c.b16 %v2032, %v2028
    %v2213 = vpack.c.b16 %v2033, %v2029
    %v2214 = vpack.c.b16 %v2038, %v2034
    %v2215 = vpack.c.b16 %v2039, %v2035
    %v2216 = vpack.c.b16 %v2040, %v2036
    %v2217 = vpack.c.b16 %v2041, %v2037
    %v2218 = vpack.c.b16 %v2046, %v2042
    %v2219 = vpack.c.b16 %v2047, %v2043
    %v2220 = vpack.c.b16 %v2048, %v2044
    %v2221 = vpack.c.b16 %v2049, %v2045
    %v2222 = vpack.c.b16 %v2054, %v2050
    %v2223 = vpack.c.b16 %v2055, %v2051
    %v2224 = vpack.c.b16 %v2056, %v2052
    %v2225 = vpack.c.b16 %v2057, %v2053
    %v2226 = vpack.c.b16 %v2062, %v2058
    %v2227 = vpack.c.b16 %v2063, %v2059
    %v2228 = vpack.c.b16 %v2064, %v2060
    %v2229 = vpack.c.b16 %v2065, %v2061
    %v2230 = vpack.c.b16 %v2070, %v2066
    %v2231 = vpack.c.b16 %v2071, %v2067
    %v2232 = vpack.c.b16 %v2072, %v2068
    %v2233 = vpack.c.b16 %v2073, %v2069
    %v2234 = vpack.c.b16 %v2078, %v2074
    %v2235 = vpack.c.b16 %v2079, %v2075
    %v2236 = vpack.c.b16 %v2080, %v2076
    %v2237 = vpack.c.b16 %v2081, %v2077
    %v2238 = vpack.c.b16 %v2086, %v2082
    %v2239 = vpack.c.b16 %v2087, %v2083
    %v2240 = vpack.c.b16 %v2088, %v2084
    %v2241 = vpack.c.b16 %v2089, %v2085
    %v2242 = vpack.c.b16 %v2094, %v2090
    %v2243 = vpack.c.b16 %v2095, %v2091
    %v2244 = vpack.c.b16 %v2096, %v2092
    %v2245 = vpack.c.b16 %v2097, %v2093
    %v2246 = vpack.c.b16 %v2102, %v2098
    %v2247 = vpack.c.b16 %v2103, %v2099
    %v2248 = vpack.c.b16 %v2104, %v2100
    %v2249 = vpack.c.b16 %v2105, %v2101
    %v2250 = vpack.c.b16 %v2110, %v2106
    %v2251 = vpack.c.b16 %v2111, %v2107
    %v2252 = vpack.c.b16 %v2112, %v2108
    %v2253 = vpack.c.b16 %v2113, %v2109
    %v2254 = vpack.c.b16 %v2118, %v2114
    %v2255 = vpack.c.b16 %v2119, %v2115
    %v2256 = vpack.c.b16 %v2120, %v2116
    %v2257 = vpack.c.b16 %v2121, %v2117
    %v2258 = vpack.c.b16 %v2126, %v2122
    %v2259 = vpack.c.b16 %v2127, %v2123
    %v2260 = vpack.c.b16 %v2128, %v2124
    %v2261 = vpack.c.b16 %v2129, %v2125
    %v2262 = vpack.c.b16 %v2134, %v2130
    %v2263 = vpack.c.b16 %v2135, %v2131
    %v2264 = vpack.c.b16 %v2136, %v2132
    %v2265 = vpack.c.b16 %v2137, %v2133
    %2394 = vmatprep.subr.bf16.mxu0 %v2167
    %2395 = vmatpush1.bf16.msra.mxu0 %v2166
    %2396 = vmatprep.subr.bf16.mxu0 %v2163
    %2397 = vmatpush1.bf16.msra.mxu0 %v2162
    %2398 = vmatprep.subr.bf16.mxu0 %v2159
    %2399 = vmatpush1.bf16.msra.mxu0 %v2158
    %2400 = vmatprep.subr.bf16.mxu0 %v2155
    %2401 = vmatpush1.bf16.msra.mxu0 %v2154
    %2402 = vmatprep.subr.bf16.mxu0 %v2151
    %2403 = vmatpush1.bf16.msra.mxu0 %v2150
    %2404 = vmatprep.subr.bf16.mxu0 %v2147
    %2405 = vmatpush1.bf16.msra.mxu0 %v2146
    %2406 = vmatprep.subr.bf16.mxu0 %v2143
    %2407 = vmatpush1.bf16.msra.mxu0 %v2142
    %2408 = vmatprep.subr.bf16.mxu0 %v2139
    %2409 = vmatpush1.bf16.msra.mxu0 %v2138
    %2410 = vmatprep.subr.bf16.mxu0 %v2199
    %2411 = vmatpush2.bf16.msra.mxu0 %v2198
    %2412 = vmatprep.subr.bf16.mxu0 %v2195
    %2413 = vmatpush2.bf16.msra.mxu0 %v2194
    %2414 = vmatprep.subr.bf16.mxu0 %v2191
    %2415 = vmatpush2.bf16.msra.mxu0 %v2190
    %2416 = vmatprep.subr.bf16.mxu0 %v2187
    %2417 = vmatpush2.bf16.msra.mxu0 %v2186
    %2418 = vmatprep.subr.bf16.mxu0 %v2183
    %2419 = vmatpush2.bf16.msra.mxu0 %v2182
    %2420 = vmatprep.subr.bf16.mxu0 %v2179
    %2421 = vmatpush2.bf16.msra.mxu0 %v2178
    %2422 = vmatprep.subr.bf16.mxu0 %v2175
    %2423 = vmatpush2.bf16.msra.mxu0 %v2174
    %2424 = vmatprep.subr.bf16.mxu0 %v2171
    %2425 = vmatpush2.bf16.msra.mxu0 %v2170
    %2426 = vmatprep.mubr.bf16.mxu0 %v1601
    %2427 = vmatmul.mubr.bf16.gmra.mxu0 %v1600
    %v2428 = vpop.f32.mrf.mxu0
    %v2429 = vadd.f32 %v1737, %v2428
    %v2430 = vpop.f32.mrf.mxu0
    %v2431 = vadd.f32 %v1741, %v2430
    %v2432 = vpop.f32.mrf.mxu0
    %v2433 = vpop.f32.mrf.mxu0
    %2434 = vdwg.mxu0
    %2435 = vmatprep.subr.bf16.mxu0 %v2231
    %2436 = vmatpush1.bf16.msra.mxu0 %v2230
    %2437 = vmatprep.subr.bf16.mxu0 %v2227
    %2438 = vmatpush1.bf16.msra.mxu0 %v2226
    %2439 = vmatprep.subr.bf16.mxu0 %v2223
    %2440 = vmatpush1.bf16.msra.mxu0 %v2222
    %2441 = vmatprep.subr.bf16.mxu0 %v2219
    %2442 = vmatpush1.bf16.msra.mxu0 %v2218
    %2443 = vmatprep.subr.bf16.mxu0 %v2215
    %2444 = vmatpush1.bf16.msra.mxu0 %v2214
    %2445 = vmatprep.subr.bf16.mxu0 %v2211
    %2446 = vmatpush1.bf16.msra.mxu0 %v2210
    %2447 = vmatprep.subr.bf16.mxu0 %v2207
    %2448 = vmatpush1.bf16.msra.mxu0 %v2206
    %2449 = vmatprep.subr.bf16.mxu0 %v2203
    %2450 = vmatpush1.bf16.msra.mxu0 %v2202
    %2451 = vmatprep.subr.bf16.mxu0 %v2263
    %2452 = vmatpush2.bf16.msra.mxu0 %v2262
    %2453 = vmatprep.subr.bf16.mxu0 %v2259
    %2454 = vmatpush2.bf16.msra.mxu0 %v2258
    %2455 = vmatprep.subr.bf16.mxu0 %v2255
    %2456 = vmatpush2.bf16.msra.mxu0 %v2254
    %2457 = vmatprep.subr.bf16.mxu0 %v2251
    %2458 = vmatpush2.bf16.msra.mxu0 %v2250
    %2459 = vmatprep.subr.bf16.mxu0 %v2247
    %2460 = vmatpush2.bf16.msra.mxu0 %v2246
    %2461 = vmatprep.subr.bf16.mxu0 %v2243
    %2462 = vmatpush2.bf16.msra.mxu0 %v2242
    %2463 = vmatprep.subr.bf16.mxu0 %v2239
    %2464 = vmatpush2.bf16.msra.mxu0 %v2238
    %2465 = vmatprep.subr.bf16.mxu0 %v2235
    %2466 = vmatpush2.bf16.msra.mxu0 %v2234
    %2467 = vmatprep.mubr.bf16.mxu0 %v1603
    %2468 = vmatmul.mubr.bf16.gmra.mxu0 %v1602
    %v2469 = vpop.f32.mrf.mxu0
    %v2470 = vadd.f32 %v2429, %v2469
    %v2471 = vpop.f32.mrf.mxu0
    %v2472 = vadd.f32 %v2431, %v2471
    %v2473 = vpop.f32.mrf.mxu0
    %v2474 = vpop.f32.mrf.mxu0
    %2475 = vdwg.mxu0
    %2476 = vmatprep.subr.bf16.mxu0 %v2169
    %2477 = vmatpush1.bf16.msra.mxu0 %v2168
    %2478 = vmatprep.subr.bf16.mxu0 %v2165
    %2479 = vmatpush1.bf16.msra.mxu0 %v2164
    %2480 = vmatprep.subr.bf16.mxu0 %v2161
    %2481 = vmatpush1.bf16.msra.mxu0 %v2160
    %2482 = vmatprep.subr.bf16.mxu0 %v2157
    %2483 = vmatpush1.bf16.msra.mxu0 %v2156
    %2484 = vmatprep.subr.bf16.mxu0 %v2153
    %2485 = vmatpush1.bf16.msra.mxu0 %v2152
    %2486 = vmatprep.subr.bf16.mxu0 %v2149
    %2487 = vmatpush1.bf16.msra.mxu0 %v2148
    %2488 = vmatprep.subr.bf16.mxu0 %v2145
    %2489 = vmatpush1.bf16.msra.mxu0 %v2144
    %2490 = vmatprep.subr.bf16.mxu0 %v2141
    %2491 = vmatpush1.bf16.msra.mxu0 %v2140
    %2492 = vmatprep.subr.bf16.mxu0 %v2201
    %2493 = vmatpush2.bf16.msra.mxu0 %v2200
    %2494 = vmatprep.subr.bf16.mxu0 %v2197
    %2495 = vmatpush2.bf16.msra.mxu0 %v2196
    %2496 = vmatprep.subr.bf16.mxu0 %v2193
    %2497 = vmatpush2.bf16.msra.mxu0 %v2192
    %2498 = vmatprep.subr.bf16.mxu0 %v2189
    %2499 = vmatpush2.bf16.msra.mxu0 %v2188
    %2500 = vmatprep.subr.bf16.mxu0 %v2185
    %2501 = vmatpush2.bf16.msra.mxu0 %v2184
    %2502 = vmatprep.subr.bf16.mxu0 %v2181
    %2503 = vmatpush2.bf16.msra.mxu0 %v2180
    %2504 = vmatprep.subr.bf16.mxu0 %v2177
    %2505 = vmatpush2.bf16.msra.mxu0 %v2176
    %2506 = vmatprep.subr.bf16.mxu0 %v2173
    %2507 = vmatpush2.bf16.msra.mxu0 %v2172
    %2508 = vmatprep.mubr.bf16.mxu0 %v1601
    %2509 = vmatmul.mubr.bf16.gmra.mxu0 %v1600
    %v2510 = vpop.f32.mrf.mxu0
    %v2511 = vadd.f32 %v1745, %v2510
    %v2512 = vpop.f32.mrf.mxu0
    %v2513 = vadd.f32 %v1749, %v2512
    %v2514 = vpop.f32.mrf.mxu0
    %v2515 = vpop.f32.mrf.mxu0
    %2516 = vdwg.mxu0
    %2517 = vmatprep.subr.bf16.mxu0 %v2233
    %2518 = vmatpush1.bf16.msra.mxu0 %v2232
    %2519 = vmatprep.subr.bf16.mxu0 %v2229
    %2520 = vmatpush1.bf16.msra.mxu0 %v2228
    %2521 = vmatprep.subr.bf16.mxu0 %v2225
    %2522 = vmatpush1.bf16.msra.mxu0 %v2224
    %2523 = vmatprep.subr.bf16.mxu0 %v2221
    %2524 = vmatpush1.bf16.msra.mxu0 %v2220
    %2525 = vmatprep.subr.bf16.mxu0 %v2217
    %2526 = vmatpush1.bf16.msra.mxu0 %v2216
    %2527 = vmatprep.subr.bf16.mxu0 %v2213
    %2528 = vmatpush1.bf16.msra.mxu0 %v2212
    %2529 = vmatprep.subr.bf16.mxu0 %v2209
    %2530 = vmatpush1.bf16.msra.mxu0 %v2208
    %2531 = vmatprep.subr.bf16.mxu0 %v2205
    %2532 = vmatpush1.bf16.msra.mxu0 %v2204
    %2533 = vmatprep.subr.bf16.mxu0 %v2265
    %2534 = vmatpush2.bf16.msra.mxu0 %v2264
    %2535 = vmatprep.subr.bf16.mxu0 %v2261
    %2536 = vmatpush2.bf16.msra.mxu0 %v2260
    %2537 = vmatprep.subr.bf16.mxu0 %v2257
    %2538 = vmatpush2.bf16.msra.mxu0 %v2256
    %2539 = vmatprep.subr.bf16.mxu0 %v2253
    %2540 = vmatpush2.bf16.msra.mxu0 %v2252
    %2541 = vmatprep.subr.bf16.mxu0 %v2249
    %2542 = vmatpush2.bf16.msra.mxu0 %v2248
    %2543 = vmatprep.subr.bf16.mxu0 %v2245
    %2544 = vmatpush2.bf16.msra.mxu0 %v2244
    %2545 = vmatprep.subr.bf16.mxu0 %v2241
    %2546 = vmatpush2.bf16.msra.mxu0 %v2240
    %2547 = vmatprep.subr.bf16.mxu0 %v2237
    %2548 = vmatpush2.bf16.msra.mxu0 %v2236
    %2549 = vmatprep.mubr.bf16.mxu0 %v1603
    %2550 = vmatmul.mubr.bf16.gmra.mxu0 %v1602
    %v2551 = vpop.f32.mrf.mxu0
    %v2552 = vadd.f32 %v2511, %v2551
    %v2553 = vpop.f32.mrf.mxu0
    %v2554 = vadd.f32 %v2513, %v2553
    %v2555 = vpop.f32.mrf.mxu0
    %v2556 = vpop.f32.mrf.mxu0
    %2557 = vdwg.mxu0
    %v2558 = vld [vmem:[%s5] sm:$0xff]
    %v2559 = vld [vmem:[%s5 + $0x8] sm:$0xff]
    %v2560 = vld [vmem:[%s5 + $0x10] sm:$0xff]
    %v2561 = vld [vmem:[%s5 + $0x18] sm:$0xff]
    %v2562 = vld [vmem:[%s5 + $0x20] sm:$0xff]
    %v2563 = vld [vmem:[%s5 + $0x28] sm:$0xff]
    %v2564 = vld [vmem:[%s5 + $0x30] sm:$0xff]
    %v2565 = vld [vmem:[%s5 + $0x38] sm:$0xff]
    %v2566 = vld [vmem:[%s5 + $0x40] sm:$0xff]
    %v2567 = vld [vmem:[%s5 + $0x48] sm:$0xff]
    %v2568 = vld [vmem:[%s5 + $0x50] sm:$0xff]
    %v2569 = vld [vmem:[%s5 + $0x58] sm:$0xff]
    %v2570 = vld [vmem:[%s5 + $0x60] sm:$0xff]
    %v2571 = vld [vmem:[%s5 + $0x68] sm:$0xff]
    %v2572 = vld [vmem:[%s5 + $0x70] sm:$0xff]
    %v2573 = vld [vmem:[%s5 + $0x78] sm:$0xff]
    %v2574 = vld [vmem:[%s5 + $0x80] sm:$0xff]
    %v2575 = vld [vmem:[%s5 + $0x88] sm:$0xff]
    %v2576 = vld [vmem:[%s5 + $0x90] sm:$0xff]
    %v2577 = vld [vmem:[%s5 + $0x98] sm:$0xff]
    %v2578 = vld [vmem:[%s5 + $0xa0] sm:$0xff]
    %v2579 = vld [vmem:[%s5 + $0xa8] sm:$0xff]
    %v2580 = vld [vmem:[%s5 + $0xb0] sm:$0xff]
    %v2581 = vld [vmem:[%s5 + $0xb8] sm:$0xff]
    %v2582 = vld [vmem:[%s5 + $0xc0] sm:$0xff]
    %v2583 = vld [vmem:[%s5 + $0xc8] sm:$0xff]
    %v2584 = vld [vmem:[%s5 + $0xd0] sm:$0xff]
    %v2585 = vld [vmem:[%s5 + $0xd8] sm:$0xff]
    %v2586 = vld [vmem:[%s5 + $0xe0] sm:$0xff]
    %v2587 = vld [vmem:[%s5 + $0xe8] sm:$0xff]
    %v2588 = vld [vmem:[%s5 + $0xf0] sm:$0xff]
    %v2589 = vld [vmem:[%s5 + $0xf8] sm:$0xff]
    %v2590 = vld [vmem:[%s5 + $0x100] sm:$0xff]
    %v2591 = vld [vmem:[%s5 + $0x108] sm:$0xff]
    %v2592 = vld [vmem:[%s5 + $0x110] sm:$0xff]
    %v2593 = vld [vmem:[%s5 + $0x118] sm:$0xff]
    %v2594 = vld [vmem:[%s5 + $0x120] sm:$0xff]
    %v2595 = vld [vmem:[%s5 + $0x128] sm:$0xff]
    %v2596 = vld [vmem:[%s5 + $0x130] sm:$0xff]
    %v2597 = vld [vmem:[%s5 + $0x138] sm:$0xff]
    %v2598 = vld [vmem:[%s5 + $0x140] sm:$0xff]
    %v2599 = vld [vmem:[%s5 + $0x148] sm:$0xff]
    %v2600 = vld [vmem:[%s5 + $0x150] sm:$0xff]
    %v2601 = vld [vmem:[%s5 + $0x158] sm:$0xff]
    %v2602 = vld [vmem:[%s5 + $0x160] sm:$0xff]
    %v2603 = vld [vmem:[%s5 + $0x168] sm:$0xff]
    %v2604 = vld [vmem:[%s5 + $0x170] sm:$0xff]
    %v2605 = vld [vmem:[%s5 + $0x178] sm:$0xff]
    %v2606 = vld [vmem:[%s5 + $0x180] sm:$0xff]
    %v2607 = vld [vmem:[%s5 + $0x188] sm:$0xff]
    %v2608 = vld [vmem:[%s5 + $0x190] sm:$0xff]
    %v2609 = vld [vmem:[%s5 + $0x198] sm:$0xff]
    %v2610 = vld [vmem:[%s5 + $0x1a0] sm:$0xff]
    %v2611 = vld [vmem:[%s5 + $0x1a8] sm:$0xff]
    %v2612 = vld [vmem:[%s5 + $0x1b0] sm:$0xff]
    %v2613 = vld [vmem:[%s5 + $0x1b8] sm:$0xff]
    %v2614 = vld [vmem:[%s5 + $0x1c0] sm:$0xff]
    %v2615 = vld [vmem:[%s5 + $0x1c8] sm:$0xff]
    %v2616 = vld [vmem:[%s5 + $0x1d0] sm:$0xff]
    %v2617 = vld [vmem:[%s5 + $0x1d8] sm:$0xff]
    %v2618 = vld [vmem:[%s5 + $0x1e0] sm:$0xff]
    %v2619 = vld [vmem:[%s5 + $0x1e8] sm:$0xff]
    %v2620 = vld [vmem:[%s5 + $0x1f0] sm:$0xff]
    %v2621 = vld [vmem:[%s5 + $0x1f8] sm:$0xff]
    %v2622 = vld [vmem:[%s6] sm:$0x1]
    %v2624 = vlaneseq
    %v2625 = vshrl.u32 %v2624, 7
    %v2626 = vsub.s32 0, %v2625
    %v2627 = vrot.slane %v2622, %v2626
    %2629 = vmatprep.subr.mxu0 0.0
    %2630 = vmatpush1.msra.mxu0 %v2573
    %2631 = vmatprep.subr.mxu0 0.0
    %2632 = vmatpush1.msra.mxu0 %v2572
    %2633 = vmatprep.subr.mxu0 0.0
    %2634 = vmatpush1.msra.mxu0 %v2571
    %2635 = vmatprep.subr.mxu0 0.0
    %2636 = vmatpush1.msra.mxu0 %v2570
    %2637 = vmatprep.subr.mxu0 0.0
    %2638 = vmatpush1.msra.mxu0 %v2569
    %2639 = vmatprep.subr.mxu0 0.0
    %2640 = vmatpush1.msra.mxu0 %v2568
    %2641 = vmatprep.subr.mxu0 0.0
    %2642 = vmatpush1.msra.mxu0 %v2567
    %2643 = vmatprep.subr.mxu0 0.0
    %2644 = vmatpush1.msra.mxu0 %v2566
    %2645 = vmatprep.subr.mxu0 0.0
    %2646 = vmatpush1.msra.mxu0 %v2565
    %2647 = vmatprep.subr.mxu0 0.0
    %2648 = vmatpush1.msra.mxu0 %v2564
    %2649 = vmatprep.subr.mxu0 0.0
    %2650 = vmatpush1.msra.mxu0 %v2563
    %2651 = vmatprep.subr.mxu0 0.0
    %2652 = vmatpush1.msra.mxu0 %v2562
    %2653 = vmatprep.subr.mxu0 0.0
    %2654 = vmatpush1.msra.mxu0 %v2561
    %2655 = vmatprep.subr.mxu0 0.0
    %2656 = vmatpush1.msra.mxu0 %v2560
    %2657 = vmatprep.subr.mxu0 0.0
    %2658 = vmatpush1.msra.mxu0 %v2559
    %2659 = vmatprep.subr.mxu0 0.0
    %2660 = vmatpush1.msra.mxu0 %v2558
    %2661 = vmatprep.subr.mxu0 0.0
    %2662 = vmatpush2.msra.mxu0 %v2589
    %2663 = vmatprep.subr.mxu0 0.0
    %2664 = vmatpush2.msra.mxu0 %v2588
    %2665 = vmatprep.subr.mxu0 0.0
    %2666 = vmatpush2.msra.mxu0 %v2587
    %2667 = vmatprep.subr.mxu0 0.0
    %2668 = vmatpush2.msra.mxu0 %v2586
    %2669 = vmatprep.subr.mxu0 0.0
    %2670 = vmatpush2.msra.mxu0 %v2585
    %2671 = vmatprep.subr.mxu0 0.0
    %2672 = vmatpush2.msra.mxu0 %v2584
    %2673 = vmatprep.subr.mxu0 0.0
    %2674 = vmatpush2.msra.mxu0 %v2583
    %2675 = vmatprep.subr.mxu0 0.0
    %2676 = vmatpush2.msra.mxu0 %v2582
    %2677 = vmatprep.subr.mxu0 0.0
    %2678 = vmatpush2.msra.mxu0 %v2581
    %2679 = vmatprep.subr.mxu0 0.0
    %2680 = vmatpush2.msra.mxu0 %v2580
    %2681 = vmatprep.subr.mxu0 0.0
    %2682 = vmatpush2.msra.mxu0 %v2579
    %2683 = vmatprep.subr.mxu0 0.0
    %2684 = vmatpush2.msra.mxu0 %v2578
    %2685 = vmatprep.subr.mxu0 0.0
    %2686 = vmatpush2.msra.mxu0 %v2577
    %2687 = vmatprep.subr.mxu0 0.0
    %2688 = vmatpush2.msra.mxu0 %v2576
    %2689 = vmatprep.subr.mxu0 0.0
    %2690 = vmatpush2.msra.mxu0 %v2575
    %2691 = vmatprep.subr.mxu0 0.0
    %2692 = vmatpush2.msra.mxu0 %v2574
    %2693 = vmatprep.mubr.f32.mxu0 %v2472
    %2694 = vmatmul.mubr.f32.gmra.mxu0 %v2470
    %v2695 = vpop.f32.mrf.mxu0
    %v2696 = vadd.f32 %v2627, %v2695
    %v2697 = vpop.f32.mrf.mxu0
    %2698 = vdwg.mxu0
    %2699 = vmatprep.subr.mxu0 0.0
    %2700 = vmatpush1.msra.mxu0 %v2605
    %2701 = vmatprep.subr.mxu0 0.0
    %2702 = vmatpush1.msra.mxu0 %v2604
    %2703 = vmatprep.subr.mxu0 0.0
    %2704 = vmatpush1.msra.mxu0 %v2603
    %2705 = vmatprep.subr.mxu0 0.0
    %2706 = vmatpush1.msra.mxu0 %v2602
    %2707 = vmatprep.subr.mxu0 0.0
    %2708 = vmatpush1.msra.mxu0 %v2601
    %2709 = vmatprep.subr.mxu0 0.0
    %2710 = vmatpush1.msra.mxu0 %v2600
    %2711 = vmatprep.subr.mxu0 0.0
    %2712 = vmatpush1.msra.mxu0 %v2599
    %2713 = vmatprep.subr.mxu0 0.0
    %2714 = vmatpush1.msra.mxu0 %v2598
    %2715 = vmatprep.subr.mxu0 0.0
    %2716 = vmatpush1.msra.mxu0 %v2597
    %2717 = vmatprep.subr.mxu0 0.0
    %2718 = vmatpush1.msra.mxu0 %v2596
    %2719 = vmatprep.subr.mxu0 0.0
    %2720 = vmatpush1.msra.mxu0 %v2595
    %2721 = vmatprep.subr.mxu0 0.0
    %2722 = vmatpush1.msra.mxu0 %v2594
    %2723 = vmatprep.subr.mxu0 0.0
    %2724 = vmatpush1.msra.mxu0 %v2593
    %2725 = vmatprep.subr.mxu0 0.0
    %2726 = vmatpush1.msra.mxu0 %v2592
    %2727 = vmatprep.subr.mxu0 0.0
    %2728 = vmatpush1.msra.mxu0 %v2591
    %2729 = vmatprep.subr.mxu0 0.0
    %2730 = vmatpush1.msra.mxu0 %v2590
    %2731 = vmatprep.subr.mxu0 0.0
    %2732 = vmatpush2.msra.mxu0 %v2621
    %2733 = vmatprep.subr.mxu0 0.0
    %2734 = vmatpush2.msra.mxu0 %v2620
    %2735 = vmatprep.subr.mxu0 0.0
    %2736 = vmatpush2.msra.mxu0 %v2619
    %2737 = vmatprep.subr.mxu0 0.0
    %2738 = vmatpush2.msra.mxu0 %v2618
    %2739 = vmatprep.subr.mxu0 0.0
    %2740 = vmatpush2.msra.mxu0 %v2617
    %2741 = vmatprep.subr.mxu0 0.0
    %2742 = vmatpush2.msra.mxu0 %v2616
    %2743 = vmatprep.subr.mxu0 0.0
    %2744 = vmatpush2.msra.mxu0 %v2615
    %2745 = vmatprep.subr.mxu0 0.0
    %2746 = vmatpush2.msra.mxu0 %v2614
    %2747 = vmatprep.subr.mxu0 0.0
    %2748 = vmatpush2.msra.mxu0 %v2613
    %2749 = vmatprep.subr.mxu0 0.0
    %2750 = vmatpush2.msra.mxu0 %v2612
    %2751 = vmatprep.subr.mxu0 0.0
    %2752 = vmatpush2.msra.mxu0 %v2611
    %2753 = vmatprep.subr.mxu0 0.0
    %2754 = vmatpush2.msra.mxu0 %v2610
    %2755 = vmatprep.subr.mxu0 0.0
    %2756 = vmatpush2.msra.mxu0 %v2609
    %2757 = vmatprep.subr.mxu0 0.0
    %2758 = vmatpush2.msra.mxu0 %v2608
    %2759 = vmatprep.subr.mxu0 0.0
    %2760 = vmatpush2.msra.mxu0 %v2607
    %2761 = vmatprep.subr.mxu0 0.0
    %2762 = vmatpush2.msra.mxu0 %v2606
    %2763 = vmatprep.mubr.f32.mxu0 %v2554
    %2764 = vmatmul.mubr.f32.gmra.mxu0 %v2552
    %v2765 = vpop.f32.mrf.mxu0
    %v2766 = vadd.f32 %v2696, %v2765
    %v2767 = vpop.f32.mrf.mxu0
    %2768 = vdwg.mxu0
    %vm2769 = vcmask 80896
    %2770 = vst.msk [vmem:[#allocation7] sm:$0xff] %vm2769, %v2766
    // Predicated region
    $region38: #{neuralnet_stu_forward.1} parent=1 // pred_check
      _
    $region39: #{neuralnet_stu_forward.1} parent=1 // pred_check_branch
      %2772 = sbr.rel (0) target = $region41
    $region40: #{neuralnet_stu_forward.1} parent=1 // pred_region
      %s2774 = ssub.s32 128, 128
      %2775 = vsyncadd [#allocation4], %s2774
      %s2777 = sshll.u32 [#allocation7], 4
      %s2778 = int_to_ptr.vmem [resolvable:$true] %s2777
      %2780 = dma.vmem_to_hbm [thread:$0]  %s2778, 128, %s7, [#allocation4]
    $region41: #{neuralnet_stu_forward.1} parent=1 // pred_fallthru
      _
    // Predicated region
    $region42: #{neuralnet_stu_forward.1} parent=1 // pred_check
      _
    $region43: #{neuralnet_stu_forward.1} parent=1 // pred_check_branch
      %2782 = sbr.rel (0) target = $region45
    $region44: #{neuralnet_stu_forward.1} parent=1 // pred_region
      %2783 = dma.done [#allocation4], 128
    $region45: #{neuralnet_stu_forward.1} parent=1 // pred_fallthru
      _
    %2784 = vsyncpa [#allocation3], 1
    %2785 = vsyncpa [#allocation6], 1
    %2786 = vsyncpa [#allocation4], 1

</llo_original>
